<compile_context>
chip_gen: v6e
topology: v6e:2x2x1
jax: 0.10.0
libtpu: 0.0.40
codegen_flags: <defaults>
</compile_context>

<pallas_src>
import jax
import jax.numpy as jnp
from jax.experimental import pallas as pl
from jax.experimental.pallas import tpu as pltpu


def _agg_kernel(x_ref, sel_ref, wp_ref, bp_ref, wf_ref, bf_ref, out_ref, acc_ref):
    # x_ref:   (bb, kb*c*h*w) lane-dense chunk of kb bag elements   [mode A]
    #          or (kb, bb, c*h*w) bag-major chunk                   [mode B]
    # sel_ref: (kb*c*h*w, c) [A] or (c*h*w, c) [B] channel selector, * 1/(bag*h*w)
    # wp_ref:  (c, dim)      synthetic backbone projection weight
    # bp_ref:  (1, dim)      synthetic backbone projection bias
    # wf_ref:  (dim, nout)   fc weight
    # bf_ref:  (1, nout)     fc bias
    # out_ref: (bb, nout)
    # acc_ref: (bb, c)       f32 scratch, persists across the bag (reduction) axis
    k = pl.program_id(1)

    @pl.when(k == 0)
    def _init():
        acc_ref[...] = jnp.zeros_like(acc_ref)

    x = x_ref[...]
    if x.ndim == 3:
        # Fallback layout: fold the bag-chunk axis with a cheap VPU sum first
        # (the GAP selector is identical for every bag element, so sum-then-GAP
        # equals GAP-then-sum).
        x = x.sum(axis=0)

    # Fused spatial GAP + bag partial-sum over kb elements: one MXU matmul,
    # no XLU reduce, the 1/(bag*h*w) scale already folded into sel.
    acc_ref[...] += jnp.dot(x, sel_ref[...], preferred_element_type=jnp.float32)

    @pl.when(k == pl.num_programs(1) - 1)
    def _finalize():
        # acc now holds the mean over (bag, h, w) per channel for this batch tile.
        feats = jnp.dot(acc_ref[...], wp_ref[...],
                        preferred_element_type=jnp.float32) + bp_ref[...]
        # Dropout(0.5) == identity at inference.
        logits = jnp.dot(feats, wf_ref[...],
                         preferred_element_type=jnp.float32) + bf_ref[...]
        out_ref[...] = logits.astype(out_ref.dtype)


_MAX_BLOCK_BYTES = 4 * 1024 * 1024  # per x block; double-buffered -> ~8 MiB resident


def _pick_batch_tile(batch, chw, max_block_bytes=_MAX_BLOCK_BYTES):
    """Batch tile: a multiple of 8 dividing batch (or the full batch), sized so a
    single-bag-element x block stays <= max_block_bytes."""
    if batch % 8 != 0:
        return batch
    bb = 8
    while (bb * 2 <= batch and batch % (bb * 2) == 0
           and (bb * 2) * chw * 4 <= max_block_bytes):
        bb *= 2
    return bb


def _pick_bag_chunk(bag, bb, chw, max_block_bytes=_MAX_BLOCK_BYTES):
    """Bag chunk: a power-of-two divisor of bag such that the (bb, kb*chw) x block
    stays <= max_block_bytes.  Larger kb => fewer grid steps, larger MXU K."""
    kb = 1
    while (kb * 2 <= bag and bag % (kb * 2) == 0
           and bb * (kb * 2) * chw * 4 <= max_block_bytes):
        kb *= 2
    return kb


def aggregation_forward(x, w_proj, b_proj, w_fc, b_fc):
    """x: (batch, bag, c, h, w) float32. Returns (batch, num_outputs) float32."""
    batch, bag, c, h, w = x.shape
    dim = w_proj.shape[1]
    nout = w_fc.shape[1]
    chw = c * h * w

    x = x.astype(jnp.float32)
    bb = _pick_batch_tile(batch, chw)
    kb = _pick_bag_chunk(bag, bb, chw)

    # Channel selector for the spatial GAP with 1/(bag*h*w) folded in, so the kernel
    # never does an explicit mean / scale.
    sel = jnp.repeat(jnp.eye(c, dtype=jnp.float32), h * w, axis=0) / float(bag * h * w)

    if chw % 128 == 0:
        # Mode A (zero-copy): block k along the lane axis is exactly bag elements
        # [k*kb, (k+1)*kb); the selector is tiled kb times so the single matmul also
        # sums over the chunk.
        x_in = x.reshape(batch, bag * chw)
        x_spec = pl.BlockSpec((bb, kb * chw), lambda i, k: (i, k))
        sel_in = jnp.tile(sel, (kb, 1))                       # (kb*chw, c)
        sel_spec = pl.BlockSpec((kb * chw, c), lambda i, k: (0, 0))
    else:
        # Mode B (fallback): bag-major layout so each block is a dense slab of kb
        # bag elements; the kernel sums the chunk axis before the matmul.
        x_in = jnp.transpose(x.reshape(batch, bag, chw), (1, 0, 2))  # (bag, batch, chw)
        x_spec = pl.BlockSpec((kb, bb, chw), lambda i, k: (k, i, 0))
        sel_in = sel                                          # (chw, c)
        sel_spec = pl.BlockSpec((chw, c), lambda i, k: (0, 0))

    flops = 2 * batch * bag * chw * c + 2 * batch * c * dim + 2 * batch * dim * nout
    bytes_accessed = 4 * (batch * bag * chw + sel_in.size + c * dim + dim
                          + dim * nout + nout + batch * nout)

    return pl.pallas_call(
        _agg_kernel,
        out_shape=jax.ShapeDtypeStruct((batch, nout), jnp.float32),
        grid_spec=pltpu.PrefetchScalarGridSpec(
            num_scalar_prefetch=0,
            grid=(batch // bb, bag // kb),    # reduction (bag) axis last / innermost
            in_specs=[
                x_spec,
                sel_spec,
                pl.BlockSpec((c, dim), lambda i, k: (0, 0)),
                pl.BlockSpec((1, dim), lambda i, k: (0, 0)),
                pl.BlockSpec((dim, nout), lambda i, k: (0, 0)),
                pl.BlockSpec((1, nout), lambda i, k: (0, 0)),
            ],
            out_specs=pl.BlockSpec((bb, nout), lambda i, k: (i, 0)),
            scratch_shapes=[pltpu.VMEM((bb, c), jnp.float32)],
        ),
        compiler_params=pltpu.CompilerParams(
            dimension_semantics=("parallel", "arbitrary")),
        cost_estimate=pl.CostEstimate(flops=flops, transcendentals=0,
                                      bytes_accessed=bytes_accessed),
    )(x_in, sel_in,
      w_proj.astype(jnp.float32),
      b_proj.reshape(1, dim).astype(jnp.float32),
      w_fc.astype(jnp.float32),
      b_fc.reshape(1, nout).astype(jnp.float32))


def _reference(x, w_proj, b_proj, w_fc, b_fc):
    batch, bag, c, h, w = x.shape
    gap = x.reshape(batch * bag, c, h * w).mean(axis=-1)
    feats = gap @ w_proj + b_proj
    feats = feats.reshape(batch, bag, -1).mean(axis=1)
    return feats @ w_fc + b_fc


if __name__ == "__main__":
    # Small shapes consistent with the module: a bag of NCHW tiles per sample.
    batch, bag, c, h, w = 2, 4, 4, 16, 16
    resnet_dim, num_outputs = 32, 2

    key = jax.random.PRNGKey(0)
    kx, kwp, kbp, kwf, kbf = jax.random.split(key, 5)

    x = jax.random.normal(kx, (batch, bag, c, h, w), dtype=jnp.float32)
    w_proj = jax.random.normal(kwp, (c, resnet_dim), dtype=jnp.float32) * 0.1
    b_proj = jax.random.normal(kbp, (resnet_dim,), dtype=jnp.float32) * 0.1
    w_fc = jax.random.normal(kwf, (resnet_dim, num_outputs), dtype=jnp.float32) * 0.1
    b_fc = jax.random.normal(kbf, (num_outputs,), dtype=jnp.float32) * 0.1

    out = aggregation_forward(x, w_proj, b_proj, w_fc, b_fc)
    out = jax.block_until_ready(out)

    ref = _reference(x, w_proj, b_proj, w_fc, b_fc)
    assert out.shape == (batch, num_outputs)
    assert jnp.allclose(out, ref, rtol=1e-4, atol=1e-4), (out, ref)

    print("KERNEL_OK")
</pallas_src>

<mosaic_0001>
module attributes {stable_mosaic.version = 11 : i64} {
  func.func @_agg_kernel(%arg0: i32, %arg1: i32, %arg2: memref<2x4096xf32, #tpu.memory_space<vmem>>, %arg3: memref<4096x4xf32, #tpu.memory_space<vmem>>, %arg4: memref<4x32xf32, #tpu.memory_space<vmem>>, %arg5: memref<1x32xf32, #tpu.memory_space<vmem>>, %arg6: memref<32x2xf32, #tpu.memory_space<vmem>>, %arg7: memref<1x2xf32, #tpu.memory_space<vmem>>, %arg8: memref<2x2xf32, #tpu.memory_space<vmem>>, %arg9: memref<2x4xf32, #tpu.memory_space<vmem>>) attributes {dimension_semantics = [#tpu.dimension_semantics<parallel>, #tpu.dimension_semantics<arbitrary>], iteration_bounds = array<i64: 1, 1>, scalar_prefetch = 0 : i64, scratch_operands = 1 : i64, tpu.core_type = #tpu.core_type<tc>, window_params = [{transform_indices = @transform_0, window_bounds = array<i64: 2, 4096>}, {pipeline_mode = #tpu.pipeline_mode<synchronous>, transform_indices = @transform_1, window_bounds = array<i64: 4096, 4>}, {pipeline_mode = #tpu.pipeline_mode<synchronous>, transform_indices = @transform_2, window_bounds = array<i64: 4, 32>}, {pipeline_mode = #tpu.pipeline_mode<synchronous>, transform_indices = @transform_3, window_bounds = array<i64: 1, 32>}, {pipeline_mode = #tpu.pipeline_mode<synchronous>, transform_indices = @transform_4, window_bounds = array<i64: 32, 2>}, {pipeline_mode = #tpu.pipeline_mode<synchronous>, transform_indices = @transform_5, window_bounds = array<i64: 1, 2>}, {transform_indices = @transform_6, window_bounds = array<i64: 2, 2>}]} {
    %c0_i32 = arith.constant 0 : i32
    %0 = arith.cmpi eq, %arg1, %c0_i32 : i32
    %1 = arith.extui %0 : i1 to i32
    %c0_i32_0 = arith.constant 0 : i32
    %2 = arith.cmpi ne, %1, %c0_i32_0 : i32
    scf.if %2 {
      %cst_10 = arith.constant 0.000000e+00 : f32
      %12 = vector.broadcast %cst_10 : f32 to vector<2x4xf32>
      %c0_11 = arith.constant 0 : index
      %c0_12 = arith.constant 0 : index
      %13 = vector.load %arg9[%c0_11, %c0_12] : memref<2x4xf32, #tpu.memory_space<vmem>>, vector<2x4xf32>
      tpu.vector_store %arg9[%c0_11, %c0_12], %12 {strides = array<i32>} : memref<2x4xf32, #tpu.memory_space<vmem>>, vector<2x4xf32>,
    } else {
    }
    %c0 = arith.constant 0 : index
    %c0_1 = arith.constant 0 : index
    %3 = vector.load %arg2[%c0, %c0_1] : memref<2x4096xf32, #tpu.memory_space<vmem>>, vector<2x4096xf32>
    %c0_2 = arith.constant 0 : index
    %c0_3 = arith.constant 0 : index
    %4 = vector.load %arg9[%c0_2, %c0_3] : memref<2x4xf32, #tpu.memory_space<vmem>>, vector<2x4xf32>
    %c0_4 = arith.constant 0 : index
    %c0_5 = arith.constant 0 : index
    %5 = vector.load %arg3[%c0_4, %c0_5] : memref<4096x4xf32, #tpu.memory_space<vmem>>, vector<4096x4xf32>
    %cst = arith.constant dense<0.000000e+00> : vector<2x4xf32>
    %6 = tpu.matmul %3, %5, %cst {dimension_numbers = #tpu.dot_dimension_numbers<[1], [0], [0], [1], [0, 0, 1, 1], [], []>} : vector<2x4096xf32>, vector<4096x4xf32>, vector<2x4xf32> -> vector<2x4xf32>
    %7 = arith.addf %4, %6 : vector<2x4xf32>
    %c0_6 = arith.constant 0 : index
    %c0_7 = arith.constant 0 : index
    %8 = vector.load %arg9[%c0_6, %c0_7] : memref<2x4xf32, #tpu.memory_space<vmem>>, vector<2x4xf32>
    tpu.vector_store %arg9[%c0_6, %c0_7], %7 {strides = array<i32>} : memref<2x4xf32, #tpu.memory_space<vmem>>, vector<2x4xf32>,
    %c0_i32_8 = arith.constant 0 : i32
    %9 = arith.cmpi eq, %arg1, %c0_i32_8 : i32
    %10 = arith.extui %9 : i1 to i32
    %c0_i32_9 = arith.constant 0 : i32
    %11 = arith.cmpi ne, %10, %c0_i32_9 : i32
    scf.if %11 {
      %c0_10 = arith.constant 0 : index
      %c0_11 = arith.constant 0 : index
      %12 = vector.load %arg9[%c0_10, %c0_11] : memref<2x4xf32, #tpu.memory_space<vmem>>, vector<2x4xf32>
      %c0_12 = arith.constant 0 : index
      %c0_13 = arith.constant 0 : index
      %13 = vector.load %arg4[%c0_12, %c0_13] : memref<4x32xf32, #tpu.memory_space<vmem>>, vector<4x32xf32>
      %cst_14 = arith.constant dense<0.000000e+00> : vector<2x32xf32>
      %14 = tpu.matmul %12, %13, %cst_14 {dimension_numbers = #tpu.dot_dimension_numbers<[1], [0], [0], [1], [0, 0, 1, 1], [], []>} : vector<2x4xf32>, vector<4x32xf32>, vector<2x32xf32> -> vector<2x32xf32>
      %c0_15 = arith.constant 0 : index
      %c0_16 = arith.constant 0 : index
      %15 = vector.load %arg5[%c0_15, %c0_16] : memref<1x32xf32, #tpu.memory_space<vmem>>, vector<1x32xf32>
      %16 = vector.broadcast %15 : vector<1x32xf32> to vector<2x32xf32>
      %17 = arith.addf %14, %16 : vector<2x32xf32>
      %c0_17 = arith.constant 0 : index
      %c0_18 = arith.constant 0 : index
      %18 = vector.load %arg6[%c0_17, %c0_18] : memref<32x2xf32, #tpu.memory_space<vmem>>, vector<32x2xf32>
      %cst_19 = arith.constant dense<0.000000e+00> : vector<2x2xf32>
      %19 = tpu.matmul %17, %18, %cst_19 {dimension_numbers = #tpu.dot_dimension_numbers<[1], [0], [0], [1], [0, 0, 1, 1], [], []>} : vector<2x32xf32>, vector<32x2xf32>, vector<2x2xf32> -> vector<2x2xf32>
      %c0_20 = arith.constant 0 : index
      %c0_21 = arith.constant 0 : index
      %20 = vector.load %arg7[%c0_20, %c0_21] : memref<1x2xf32, #tpu.memory_space<vmem>>, vector<1x2xf32>
      %21 = vector.broadcast %20 : vector<1x2xf32> to vector<2x2xf32>
      %22 = arith.addf %19, %21 : vector<2x2xf32>
      %c0_22 = arith.constant 0 : index
      %c0_23 = arith.constant 0 : index
      %23 = vector.load %arg8[%c0_22, %c0_23] : memref<2x2xf32, #tpu.memory_space<vmem>>, vector<2x2xf32>
      tpu.vector_store %arg8[%c0_22, %c0_23], %22 {strides = array<i32>} : memref<2x2xf32, #tpu.memory_space<vmem>>, vector<2x2xf32>,
    } else {
    }
    return
  }
  func.func @transform_0(%arg0: i32, %arg1: i32) -> (i32, i32) {
    %c0_i32 = arith.constant 0 : i32
    return %arg0, %arg1 : i32, i32
  }
  func.func @transform_1(%arg0: i32, %arg1: i32) -> (i32, i32) {
    %c0_i32 = arith.constant 0 : i32
    %c0_i32_0 = arith.constant 0 : i32
    %c0_i32_1 = arith.constant 0 : i32
    return %c0_i32, %c0_i32_0 : i32, i32
  }
  func.func @transform_2(%arg0: i32, %arg1: i32) -> (i32, i32) {
    %c0_i32 = arith.constant 0 : i32
    %c0_i32_0 = arith.constant 0 : i32
    %c0_i32_1 = arith.constant 0 : i32
    return %c0_i32, %c0_i32_0 : i32, i32
  }
  func.func @transform_3(%arg0: i32, %arg1: i32) -> (i32, i32) {
    %c0_i32 = arith.constant 0 : i32
    %c0_i32_0 = arith.constant 0 : i32
    %c0_i32_1 = arith.constant 0 : i32
    return %c0_i32, %c0_i32_0 : i32, i32
  }
  func.func @transform_4(%arg0: i32, %arg1: i32) -> (i32, i32) {
    %c0_i32 = arith.constant 0 : i32
    %c0_i32_0 = arith.constant 0 : i32
    %c0_i32_1 = arith.constant 0 : i32
    return %c0_i32, %c0_i32_0 : i32, i32
  }
  func.func @transform_5(%arg0: i32, %arg1: i32) -> (i32, i32) {
    %c0_i32 = arith.constant 0 : i32
    %c0_i32_0 = arith.constant 0 : i32
    %c0_i32_1 = arith.constant 0 : i32
    return %c0_i32, %c0_i32_0 : i32, i32
  }
  func.func @transform_6(%arg0: i32, %arg1: i32) -> (i32, i32) {
    %c0_i32 = arith.constant 0 : i32
    %c0_i32_0 = arith.constant 0 : i32
    return %arg0, %c0_i32 : i32, i32
  }
}

</mosaic_0001>

<llo_original>
// kernel: tpu_custom_call.1
$region0: #{tpu_custom_call.1}
  #allocation0 [shape = 'u32[]', space=smem, size = 0x4, offset = 0x4, fixed_abs, tag = 'smem constant byte address 0x4 - core index']
  #allocation1 [shape = 'u32[144,128]{1,0:T(1,128)}', space=vmem, size = 0x12000, scoped, tag = 'internal scratch']
  #allocation2 [shape = 'f32[2,4]{1,0:T(2,128)}', space=vmem, size = 0x400, scoped, tag = 'scratch operand']
  %s0 = inlined_call_operand.vmem [shape: f32[2,4096], index: 0, kind: input, shape index: {}]
  %s1 = inlined_call_operand.vmem [shape: f32[4096,4], index: 1, kind: input, shape index: {}]
  %s2 = inlined_call_operand.vmem [shape: f32[4,32], index: 2, kind: input, shape index: {}]
  %s3 = inlined_call_operand.vmem [shape: f32[1,32], index: 3, kind: input, shape index: {}]
  %s4 = inlined_call_operand.vmem [shape: f32[32,2], index: 4, kind: input, shape index: {}]
  %s5 = inlined_call_operand.vmem [shape: f32[1,2], index: 5, kind: input, shape index: {}]
  %s6 = inlined_call_operand.hbm [shape: f32[2,2], index: 6, kind: output, shape index: {}]
  %s7 = sld [smem:[#allocation0]]
  $region42: #{tpu_custom_call.1} parent=0
    _
  %s9 = ssub.s32 1, %s7
  %s10 = scalar_select 0, %s9, %s7
  $region1: #{tpu_custom_call.1} parent=0
    #allocation3 [shape = 'u8[1024]{0}', space=vmem, size = 0x400, scoped, tag = 'output window, operand 0, single buffered']
    #allocation4 [shape = 's32[1]{0}', space=sflag, size = 0x4, scoped, tag = 'scoped memory for tpu_custom_call.1']
    %11 = vsyncpa [#allocation4], 0
    // Predicated region
    $region2: #{tpu_custom_call.1} parent=1 // pred_check
      _
    $region3: #{tpu_custom_call.1} parent=1 // pred_check_branch
      %13 = sbr.rel (0) target = $region5
    $region4: #{tpu_custom_call.1} parent=1 // pred_region
      _
    $region5: #{tpu_custom_call.1} parent=1 // pred_fallthru
      _
    // Predicated region
    $region6: #{tpu_custom_call.1} parent=1 // pred_check
      _
    $region7: #{tpu_custom_call.1} parent=1 // pred_check_branch
      %15 = sbr.rel (0) target = $region9
    $region8: #{tpu_custom_call.1} parent=1 // pred_region
      _
    $region9: #{tpu_custom_call.1} parent=1 // pred_fallthru
      _
    // Predicated region
    $region10: #{tpu_custom_call.1} parent=1 // pred_check
      _
    $region11: #{tpu_custom_call.1} parent=1 // pred_check_branch
      %17 = sbr.rel (0) target = $region13
    $region12: #{tpu_custom_call.1} parent=1 // pred_region
      _
    $region13: #{tpu_custom_call.1} parent=1 // pred_fallthru
      _
    // Predicated region
    $region14: #{tpu_custom_call.1} parent=1 // pred_check
      _
    $region15: #{tpu_custom_call.1} parent=1 // pred_check_branch
      %19 = sbr.rel (0) target = $region17
    $region16: #{tpu_custom_call.1} parent=1 // pred_region
      _
    $region17: #{tpu_custom_call.1} parent=1 // pred_fallthru
      _
    // Predicated region
    $region18: #{tpu_custom_call.1} parent=1 // pred_check
      _
    $region19: #{tpu_custom_call.1} parent=1 // pred_check_branch
      %21 = sbr.rel (0) target = $region21
    $region20: #{tpu_custom_call.1} parent=1 // pred_region
      _
    $region21: #{tpu_custom_call.1} parent=1 // pred_fallthru
      _
    // Predicated region
    $region22: #{tpu_custom_call.1} parent=1 // pred_check
      _
    $region23: #{tpu_custom_call.1} parent=1 // pred_check_branch
      %23 = sbr.rel (0) target = $region25
    $region24: #{tpu_custom_call.1} parent=1 // pred_region
      _
    $region25: #{tpu_custom_call.1} parent=1 // pred_fallthru
      _
    %p24 = scmp.eq.s32.totalorder 0, 0
    // Predicated region
    $region26: #{tpu_custom_call.1} parent=1 // pred_check
      %p25 = pneg %p24
    $region27: #{tpu_custom_call.1} parent=1 // pred_check_branch
      %27 = sbr.rel (%p25) target = $region29
    $region28: #{tpu_custom_call.1} parent=1 // pred_region
      %vm28 = vcmask 25600
      %29 = vst.msk [vmem:[#allocation2] sm:$0x3] %vm28, 0.0
    $region29: #{tpu_custom_call.1} parent=1 // pred_fallthru
      _
    %v30 = vld [vmem:[%s0] sm:$0xff]
    %v31 = vld [vmem:[%s0 + $0x8] sm:$0xff]
    %v32 = vld [vmem:[%s0 + $0x10] sm:$0xff]
    %v33 = vld [vmem:[%s0 + $0x18] sm:$0xff]
    %v34 = vld [vmem:[%s0 + $0x20] sm:$0xff]
    %v35 = vld [vmem:[%s0 + $0x28] sm:$0xff]
    %v36 = vld [vmem:[%s0 + $0x30] sm:$0xff]
    %v37 = vld [vmem:[%s0 + $0x38] sm:$0xff]
    %v38 = vld [vmem:[#allocation2] sm:$0x3]
    %v39 = vld [vmem:[%s1] sm:$0xff]
    %v40 = vld [vmem:[%s1 + $0x8] sm:$0xff]
    %v41 = vld [vmem:[%s1 + $0x10] sm:$0xff]
    %v42 = vld [vmem:[%s1 + $0x18] sm:$0xff]
    %v43 = vld [vmem:[%s1 + $0x20] sm:$0xff]
    %v44 = vld [vmem:[%s1 + $0x28] sm:$0xff]
    %v45 = vld [vmem:[%s1 + $0x30] sm:$0xff]
    %v46 = vld [vmem:[%s1 + $0x38] sm:$0xff]
    %v47 = vld [vmem:[%s1 + $0x40] sm:$0xff]
    %v48 = vld [vmem:[%s1 + $0x48] sm:$0xff]
    %v49 = vld [vmem:[%s1 + $0x50] sm:$0xff]
    %v50 = vld [vmem:[%s1 + $0x58] sm:$0xff]
    %v51 = vld [vmem:[%s1 + $0x60] sm:$0xff]
    %v52 = vld [vmem:[%s1 + $0x68] sm:$0xff]
    %v53 = vld [vmem:[%s1 + $0x70] sm:$0xff]
    %v54 = vld [vmem:[%s1 + $0x78] sm:$0xff]
    %v55 = vld [vmem:[%s1 + $0x80] sm:$0xff]
    %v56 = vld [vmem:[%s1 + $0x88] sm:$0xff]
    %v57 = vld [vmem:[%s1 + $0x90] sm:$0xff]
    %v58 = vld [vmem:[%s1 + $0x98] sm:$0xff]
    %v59 = vld [vmem:[%s1 + $0xa0] sm:$0xff]
    %v60 = vld [vmem:[%s1 + $0xa8] sm:$0xff]
    %v61 = vld [vmem:[%s1 + $0xb0] sm:$0xff]
    %v62 = vld [vmem:[%s1 + $0xb8] sm:$0xff]
    %v63 = vld [vmem:[%s1 + $0xc0] sm:$0xff]
    %v64 = vld [vmem:[%s1 + $0xc8] sm:$0xff]
    %v65 = vld [vmem:[%s1 + $0xd0] sm:$0xff]
    %v66 = vld [vmem:[%s1 + $0xd8] sm:$0xff]
    %v67 = vld [vmem:[%s1 + $0xe0] sm:$0xff]
    %v68 = vld [vmem:[%s1 + $0xe8] sm:$0xff]
    %v69 = vld [vmem:[%s1 + $0xf0] sm:$0xff]
    %v70 = vld [vmem:[%s1 + $0xf8] sm:$0xff]
    %v71 = vld [vmem:[%s1 + $0x100] sm:$0xff]
    %v72 = vld [vmem:[%s1 + $0x108] sm:$0xff]
    %v73 = vld [vmem:[%s1 + $0x110] sm:$0xff]
    %v74 = vld [vmem:[%s1 + $0x118] sm:$0xff]
    %v75 = vld [vmem:[%s1 + $0x120] sm:$0xff]
    %v76 = vld [vmem:[%s1 + $0x128] sm:$0xff]
    %v77 = vld [vmem:[%s1 + $0x130] sm:$0xff]
    %v78 = vld [vmem:[%s1 + $0x138] sm:$0xff]
    %v79 = vld [vmem:[%s1 + $0x140] sm:$0xff]
    %v80 = vld [vmem:[%s1 + $0x148] sm:$0xff]
    %v81 = vld [vmem:[%s1 + $0x150] sm:$0xff]
    %v82 = vld [vmem:[%s1 + $0x158] sm:$0xff]
    %v83 = vld [vmem:[%s1 + $0x160] sm:$0xff]
    %v84 = vld [vmem:[%s1 + $0x168] sm:$0xff]
    %v85 = vld [vmem:[%s1 + $0x170] sm:$0xff]
    %v86 = vld [vmem:[%s1 + $0x178] sm:$0xff]
    %v87 = vld [vmem:[%s1 + $0x180] sm:$0xff]
    %v88 = vld [vmem:[%s1 + $0x188] sm:$0xff]
    %v89 = vld [vmem:[%s1 + $0x190] sm:$0xff]
    %v90 = vld [vmem:[%s1 + $0x198] sm:$0xff]
    %v91 = vld [vmem:[%s1 + $0x1a0] sm:$0xff]
    %v92 = vld [vmem:[%s1 + $0x1a8] sm:$0xff]
    %v93 = vld [vmem:[%s1 + $0x1b0] sm:$0xff]
    %v94 = vld [vmem:[%s1 + $0x1b8] sm:$0xff]
    %v95 = vld [vmem:[%s1 + $0x1c0] sm:$0xff]
    %v96 = vld [vmem:[%s1 + $0x1c8] sm:$0xff]
    %v97 = vld [vmem:[%s1 + $0x1d0] sm:$0xff]
    %v98 = vld [vmem:[%s1 + $0x1d8] sm:$0xff]
    %v99 = vld [vmem:[%s1 + $0x1e0] sm:$0xff]
    %v100 = vld [vmem:[%s1 + $0x1e8] sm:$0xff]
    %v101 = vld [vmem:[%s1 + $0x1f0] sm:$0xff]
    %v102 = vld [vmem:[%s1 + $0x1f8] sm:$0xff]
    %v103 = vld [vmem:[%s1 + $0x200] sm:$0xff]
    %v104 = vld [vmem:[%s1 + $0x208] sm:$0xff]
    %v105 = vld [vmem:[%s1 + $0x210] sm:$0xff]
    %v106 = vld [vmem:[%s1 + $0x218] sm:$0xff]
    %v107 = vld [vmem:[%s1 + $0x220] sm:$0xff]
    %v108 = vld [vmem:[%s1 + $0x228] sm:$0xff]
    %v109 = vld [vmem:[%s1 + $0x230] sm:$0xff]
    %v110 = vld [vmem:[%s1 + $0x238] sm:$0xff]
    %v111 = vld [vmem:[%s1 + $0x240] sm:$0xff]
    %v112 = vld [vmem:[%s1 + $0x248] sm:$0xff]
    %v113 = vld [vmem:[%s1 + $0x250] sm:$0xff]
    %v114 = vld [vmem:[%s1 + $0x258] sm:$0xff]
    %v115 = vld [vmem:[%s1 + $0x260] sm:$0xff]
    %v116 = vld [vmem:[%s1 + $0x268] sm:$0xff]
    %v117 = vld [vmem:[%s1 + $0x270] sm:$0xff]
    %v118 = vld [vmem:[%s1 + $0x278] sm:$0xff]
    %v119 = vld [vmem:[%s1 + $0x280] sm:$0xff]
    %v120 = vld [vmem:[%s1 + $0x288] sm:$0xff]
    %v121 = vld [vmem:[%s1 + $0x290] sm:$0xff]
    %v122 = vld [vmem:[%s1 + $0x298] sm:$0xff]
    %v123 = vld [vmem:[%s1 + $0x2a0] sm:$0xff]
    %v124 = vld [vmem:[%s1 + $0x2a8] sm:$0xff]
    %v125 = vld [vmem:[%s1 + $0x2b0] sm:$0xff]
    %v126 = vld [vmem:[%s1 + $0x2b8] sm:$0xff]
    %v127 = vld [vmem:[%s1 + $0x2c0] sm:$0xff]
    %v128 = vld [vmem:[%s1 + $0x2c8] sm:$0xff]
    %v129 = vld [vmem:[%s1 + $0x2d0] sm:$0xff]
    %v130 = vld [vmem:[%s1 + $0x2d8] sm:$0xff]
    %v131 = vld [vmem:[%s1 + $0x2e0] sm:$0xff]
    %v132 = vld [vmem:[%s1 + $0x2e8] sm:$0xff]
    %v133 = vld [vmem:[%s1 + $0x2f0] sm:$0xff]
    %v134 = vld [vmem:[%s1 + $0x2f8] sm:$0xff]
    %v135 = vld [vmem:[%s1 + $0x300] sm:$0xff]
    %v136 = vld [vmem:[%s1 + $0x308] sm:$0xff]
    %v137 = vld [vmem:[%s1 + $0x310] sm:$0xff]
    %v138 = vld [vmem:[%s1 + $0x318] sm:$0xff]
    %v139 = vld [vmem:[%s1 + $0x320] sm:$0xff]
    %v140 = vld [vmem:[%s1 + $0x328] sm:$0xff]
    %v141 = vld [vmem:[%s1 + $0x330] sm:$0xff]
    %v142 = vld [vmem:[%s1 + $0x338] sm:$0xff]
    %v143 = vld [vmem:[%s1 + $0x340] sm:$0xff]
    %v144 = vld [vmem:[%s1 + $0x348] sm:$0xff]
    %v145 = vld [vmem:[%s1 + $0x350] sm:$0xff]
    %v146 = vld [vmem:[%s1 + $0x358] sm:$0xff]
    %v147 = vld [vmem:[%s1 + $0x360] sm:$0xff]
    %v148 = vld [vmem:[%s1 + $0x368] sm:$0xff]
    %v149 = vld [vmem:[%s1 + $0x370] sm:$0xff]
    %v150 = vld [vmem:[%s1 + $0x378] sm:$0xff]
    %v151 = vld [vmem:[%s1 + $0x380] sm:$0xff]
    %v152 = vld [vmem:[%s1 + $0x388] sm:$0xff]
    %v153 = vld [vmem:[%s1 + $0x390] sm:$0xff]
    %v154 = vld [vmem:[%s1 + $0x398] sm:$0xff]
    %v155 = vld [vmem:[%s1 + $0x3a0] sm:$0xff]
    %v156 = vld [vmem:[%s1 + $0x3a8] sm:$0xff]
    %v157 = vld [vmem:[%s1 + $0x3b0] sm:$0xff]
    %v158 = vld [vmem:[%s1 + $0x3b8] sm:$0xff]
    %v159 = vld [vmem:[%s1 + $0x3c0] sm:$0xff]
    %v160 = vld [vmem:[%s1 + $0x3c8] sm:$0xff]
    %v161 = vld [vmem:[%s1 + $0x3d0] sm:$0xff]
    %v162 = vld [vmem:[%s1 + $0x3d8] sm:$0xff]
    %v163 = vld [vmem:[%s1 + $0x3e0] sm:$0xff]
    %v164 = vld [vmem:[%s1 + $0x3e8] sm:$0xff]
    %v165 = vld [vmem:[%s1 + $0x3f0] sm:$0xff]
    %v166 = vld [vmem:[%s1 + $0x3f8] sm:$0xff]
    %v167 = vld [vmem:[%s1 + $0x400] sm:$0xff]
    %v168 = vld [vmem:[%s1 + $0x408] sm:$0xff]
    %v169 = vld [vmem:[%s1 + $0x410] sm:$0xff]
    %v170 = vld [vmem:[%s1 + $0x418] sm:$0xff]
    %v171 = vld [vmem:[%s1 + $0x420] sm:$0xff]
    %v172 = vld [vmem:[%s1 + $0x428] sm:$0xff]
    %v173 = vld [vmem:[%s1 + $0x430] sm:$0xff]
    %v174 = vld [vmem:[%s1 + $0x438] sm:$0xff]
    %v175 = vld [vmem:[%s1 + $0x440] sm:$0xff]
    %v176 = vld [vmem:[%s1 + $0x448] sm:$0xff]
    %v177 = vld [vmem:[%s1 + $0x450] sm:$0xff]
    %v178 = vld [vmem:[%s1 + $0x458] sm:$0xff]
    %v179 = vld [vmem:[%s1 + $0x460] sm:$0xff]
    %v180 = vld [vmem:[%s1 + $0x468] sm:$0xff]
    %v181 = vld [vmem:[%s1 + $0x470] sm:$0xff]
    %v182 = vld [vmem:[%s1 + $0x478] sm:$0xff]
    %v183 = vld [vmem:[%s1 + $0x480] sm:$0xff]
    %v184 = vld [vmem:[%s1 + $0x488] sm:$0xff]
    %v185 = vld [vmem:[%s1 + $0x490] sm:$0xff]
    %v186 = vld [vmem:[%s1 + $0x498] sm:$0xff]
    %v187 = vld [vmem:[%s1 + $0x4a0] sm:$0xff]
    %v188 = vld [vmem:[%s1 + $0x4a8] sm:$0xff]
    %v189 = vld [vmem:[%s1 + $0x4b0] sm:$0xff]
    %v190 = vld [vmem:[%s1 + $0x4b8] sm:$0xff]
    %v191 = vld [vmem:[%s1 + $0x4c0] sm:$0xff]
    %v192 = vld [vmem:[%s1 + $0x4c8] sm:$0xff]
    %v193 = vld [vmem:[%s1 + $0x4d0] sm:$0xff]
    %v194 = vld [vmem:[%s1 + $0x4d8] sm:$0xff]
    %v195 = vld [vmem:[%s1 + $0x4e0] sm:$0xff]
    %v196 = vld [vmem:[%s1 + $0x4e8] sm:$0xff]
    %v197 = vld [vmem:[%s1 + $0x4f0] sm:$0xff]
    %v198 = vld [vmem:[%s1 + $0x4f8] sm:$0xff]
    %v199 = vld [vmem:[%s1 + $0x500] sm:$0xff]
    %v200 = vld [vmem:[%s1 + $0x508] sm:$0xff]
    %v201 = vld [vmem:[%s1 + $0x510] sm:$0xff]
    %v202 = vld [vmem:[%s1 + $0x518] sm:$0xff]
    %v203 = vld [vmem:[%s1 + $0x520] sm:$0xff]
    %v204 = vld [vmem:[%s1 + $0x528] sm:$0xff]
    %v205 = vld [vmem:[%s1 + $0x530] sm:$0xff]
    %v206 = vld [vmem:[%s1 + $0x538] sm:$0xff]
    %v207 = vld [vmem:[%s1 + $0x540] sm:$0xff]
    %v208 = vld [vmem:[%s1 + $0x548] sm:$0xff]
    %v209 = vld [vmem:[%s1 + $0x550] sm:$0xff]
    %v210 = vld [vmem:[%s1 + $0x558] sm:$0xff]
    %v211 = vld [vmem:[%s1 + $0x560] sm:$0xff]
    %v212 = vld [vmem:[%s1 + $0x568] sm:$0xff]
    %v213 = vld [vmem:[%s1 + $0x570] sm:$0xff]
    %v214 = vld [vmem:[%s1 + $0x578] sm:$0xff]
    %v215 = vld [vmem:[%s1 + $0x580] sm:$0xff]
    %v216 = vld [vmem:[%s1 + $0x588] sm:$0xff]
    %v217 = vld [vmem:[%s1 + $0x590] sm:$0xff]
    %v218 = vld [vmem:[%s1 + $0x598] sm:$0xff]
    %v219 = vld [vmem:[%s1 + $0x5a0] sm:$0xff]
    %v220 = vld [vmem:[%s1 + $0x5a8] sm:$0xff]
    %v221 = vld [vmem:[%s1 + $0x5b0] sm:$0xff]
    %v222 = vld [vmem:[%s1 + $0x5b8] sm:$0xff]
    %v223 = vld [vmem:[%s1 + $0x5c0] sm:$0xff]
    %v224 = vld [vmem:[%s1 + $0x5c8] sm:$0xff]
    %v225 = vld [vmem:[%s1 + $0x5d0] sm:$0xff]
    %v226 = vld [vmem:[%s1 + $0x5d8] sm:$0xff]
    %v227 = vld [vmem:[%s1 + $0x5e0] sm:$0xff]
    %v228 = vld [vmem:[%s1 + $0x5e8] sm:$0xff]
    %v229 = vld [vmem:[%s1 + $0x5f0] sm:$0xff]
    %v230 = vld [vmem:[%s1 + $0x5f8] sm:$0xff]
    %v231 = vld [vmem:[%s1 + $0x600] sm:$0xff]
    %v232 = vld [vmem:[%s1 + $0x608] sm:$0xff]
    %v233 = vld [vmem:[%s1 + $0x610] sm:$0xff]
    %v234 = vld [vmem:[%s1 + $0x618] sm:$0xff]
    %v235 = vld [vmem:[%s1 + $0x620] sm:$0xff]
    %v236 = vld [vmem:[%s1 + $0x628] sm:$0xff]
    %v237 = vld [vmem:[%s1 + $0x630] sm:$0xff]
    %v238 = vld [vmem:[%s1 + $0x638] sm:$0xff]
    %v239 = vld [vmem:[%s1 + $0x640] sm:$0xff]
    %v240 = vld [vmem:[%s1 + $0x648] sm:$0xff]
    %v241 = vld [vmem:[%s1 + $0x650] sm:$0xff]
    %v242 = vld [vmem:[%s1 + $0x658] sm:$0xff]
    %v243 = vld [vmem:[%s1 + $0x660] sm:$0xff]
    %v244 = vld [vmem:[%s1 + $0x668] sm:$0xff]
    %v245 = vld [vmem:[%s1 + $0x670] sm:$0xff]
    %v246 = vld [vmem:[%s1 + $0x678] sm:$0xff]
    %v247 = vld [vmem:[%s1 + $0x680] sm:$0xff]
    %v248 = vld [vmem:[%s1 + $0x688] sm:$0xff]
    %v249 = vld [vmem:[%s1 + $0x690] sm:$0xff]
    %v250 = vld [vmem:[%s1 + $0x698] sm:$0xff]
    %v251 = vld [vmem:[%s1 + $0x6a0] sm:$0xff]
    %v252 = vld [vmem:[%s1 + $0x6a8] sm:$0xff]
    %v253 = vld [vmem:[%s1 + $0x6b0] sm:$0xff]
    %v254 = vld [vmem:[%s1 + $0x6b8] sm:$0xff]
    %v255 = vld [vmem:[%s1 + $0x6c0] sm:$0xff]
    %v256 = vld [vmem:[%s1 + $0x6c8] sm:$0xff]
    %v257 = vld [vmem:[%s1 + $0x6d0] sm:$0xff]
    %v258 = vld [vmem:[%s1 + $0x6d8] sm:$0xff]
    %v259 = vld [vmem:[%s1 + $0x6e0] sm:$0xff]
    %v260 = vld [vmem:[%s1 + $0x6e8] sm:$0xff]
    %v261 = vld [vmem:[%s1 + $0x6f0] sm:$0xff]
    %v262 = vld [vmem:[%s1 + $0x6f8] sm:$0xff]
    %v263 = vld [vmem:[%s1 + $0x700] sm:$0xff]
    %v264 = vld [vmem:[%s1 + $0x708] sm:$0xff]
    %v265 = vld [vmem:[%s1 + $0x710] sm:$0xff]
    %v266 = vld [vmem:[%s1 + $0x718] sm:$0xff]
    %v267 = vld [vmem:[%s1 + $0x720] sm:$0xff]
    %v268 = vld [vmem:[%s1 + $0x728] sm:$0xff]
    %v269 = vld [vmem:[%s1 + $0x730] sm:$0xff]
    %v270 = vld [vmem:[%s1 + $0x738] sm:$0xff]
    %v271 = vld [vmem:[%s1 + $0x740] sm:$0xff]
    %v272 = vld [vmem:[%s1 + $0x748] sm:$0xff]
    %v273 = vld [vmem:[%s1 + $0x750] sm:$0xff]
    %v274 = vld [vmem:[%s1 + $0x758] sm:$0xff]
    %v275 = vld [vmem:[%s1 + $0x760] sm:$0xff]
    %v276 = vld [vmem:[%s1 + $0x768] sm:$0xff]
    %v277 = vld [vmem:[%s1 + $0x770] sm:$0xff]
    %v278 = vld [vmem:[%s1 + $0x778] sm:$0xff]
    %v279 = vld [vmem:[%s1 + $0x780] sm:$0xff]
    %v280 = vld [vmem:[%s1 + $0x788] sm:$0xff]
    %v281 = vld [vmem:[%s1 + $0x790] sm:$0xff]
    %v282 = vld [vmem:[%s1 + $0x798] sm:$0xff]
    %v283 = vld [vmem:[%s1 + $0x7a0] sm:$0xff]
    %v284 = vld [vmem:[%s1 + $0x7a8] sm:$0xff]
    %v285 = vld [vmem:[%s1 + $0x7b0] sm:$0xff]
    %v286 = vld [vmem:[%s1 + $0x7b8] sm:$0xff]
    %v287 = vld [vmem:[%s1 + $0x7c0] sm:$0xff]
    %v288 = vld [vmem:[%s1 + $0x7c8] sm:$0xff]
    %v289 = vld [vmem:[%s1 + $0x7d0] sm:$0xff]
    %v290 = vld [vmem:[%s1 + $0x7d8] sm:$0xff]
    %v291 = vld [vmem:[%s1 + $0x7e0] sm:$0xff]
    %v292 = vld [vmem:[%s1 + $0x7e8] sm:$0xff]
    %v293 = vld [vmem:[%s1 + $0x7f0] sm:$0xff]
    %v294 = vld [vmem:[%s1 + $0x7f8] sm:$0xff]
    %v295 = vld [vmem:[%s1 + $0x800] sm:$0xff]
    %v296 = vld [vmem:[%s1 + $0x808] sm:$0xff]
    %v297 = vld [vmem:[%s1 + $0x810] sm:$0xff]
    %v298 = vld [vmem:[%s1 + $0x818] sm:$0xff]
    %v299 = vld [vmem:[%s1 + $0x820] sm:$0xff]
    %v300 = vld [vmem:[%s1 + $0x828] sm:$0xff]
    %v301 = vld [vmem:[%s1 + $0x830] sm:$0xff]
    %v302 = vld [vmem:[%s1 + $0x838] sm:$0xff]
    %v303 = vld [vmem:[%s1 + $0x840] sm:$0xff]
    %v304 = vld [vmem:[%s1 + $0x848] sm:$0xff]
    %v305 = vld [vmem:[%s1 + $0x850] sm:$0xff]
    %v306 = vld [vmem:[%s1 + $0x858] sm:$0xff]
    %v307 = vld [vmem:[%s1 + $0x860] sm:$0xff]
    %v308 = vld [vmem:[%s1 + $0x868] sm:$0xff]
    %v309 = vld [vmem:[%s1 + $0x870] sm:$0xff]
    %v310 = vld [vmem:[%s1 + $0x878] sm:$0xff]
    %v311 = vld [vmem:[%s1 + $0x880] sm:$0xff]
    %v312 = vld [vmem:[%s1 + $0x888] sm:$0xff]
    %v313 = vld [vmem:[%s1 + $0x890] sm:$0xff]
    %v314 = vld [vmem:[%s1 + $0x898] sm:$0xff]
    %v315 = vld [vmem:[%s1 + $0x8a0] sm:$0xff]
    %v316 = vld [vmem:[%s1 + $0x8a8] sm:$0xff]
    %v317 = vld [vmem:[%s1 + $0x8b0] sm:$0xff]
    %v318 = vld [vmem:[%s1 + $0x8b8] sm:$0xff]
    %v319 = vld [vmem:[%s1 + $0x8c0] sm:$0xff]
    %v320 = vld [vmem:[%s1 + $0x8c8] sm:$0xff]
    %v321 = vld [vmem:[%s1 + $0x8d0] sm:$0xff]
    %v322 = vld [vmem:[%s1 + $0x8d8] sm:$0xff]
    %v323 = vld [vmem:[%s1 + $0x8e0] sm:$0xff]
    %v324 = vld [vmem:[%s1 + $0x8e8] sm:$0xff]
    %v325 = vld [vmem:[%s1 + $0x8f0] sm:$0xff]
    %v326 = vld [vmem:[%s1 + $0x8f8] sm:$0xff]
    %v327 = vld [vmem:[%s1 + $0x900] sm:$0xff]
    %v328 = vld [vmem:[%s1 + $0x908] sm:$0xff]
    %v329 = vld [vmem:[%s1 + $0x910] sm:$0xff]
    %v330 = vld [vmem:[%s1 + $0x918] sm:$0xff]
    %v331 = vld [vmem:[%s1 + $0x920] sm:$0xff]
    %v332 = vld [vmem:[%s1 + $0x928] sm:$0xff]
    %v333 = vld [vmem:[%s1 + $0x930] sm:$0xff]
    %v334 = vld [vmem:[%s1 + $0x938] sm:$0xff]
    %v335 = vld [vmem:[%s1 + $0x940] sm:$0xff]
    %v336 = vld [vmem:[%s1 + $0x948] sm:$0xff]
    %v337 = vld [vmem:[%s1 + $0x950] sm:$0xff]
    %v338 = vld [vmem:[%s1 + $0x958] sm:$0xff]
    %v339 = vld [vmem:[%s1 + $0x960] sm:$0xff]
    %v340 = vld [vmem:[%s1 + $0x968] sm:$0xff]
    %v341 = vld [vmem:[%s1 + $0x970] sm:$0xff]
    %v342 = vld [vmem:[%s1 + $0x978] sm:$0xff]
    %v343 = vld [vmem:[%s1 + $0x980] sm:$0xff]
    %v344 = vld [vmem:[%s1 + $0x988] sm:$0xff]
    %v345 = vld [vmem:[%s1 + $0x990] sm:$0xff]
    %v346 = vld [vmem:[%s1 + $0x998] sm:$0xff]
    %v347 = vld [vmem:[%s1 + $0x9a0] sm:$0xff]
    %v348 = vld [vmem:[%s1 + $0x9a8] sm:$0xff]
    %v349 = vld [vmem:[%s1 + $0x9b0] sm:$0xff]
    %v350 = vld [vmem:[%s1 + $0x9b8] sm:$0xff]
    %v351 = vld [vmem:[%s1 + $0x9c0] sm:$0xff]
    %v352 = vld [vmem:[%s1 + $0x9c8] sm:$0xff]
    %v353 = vld [vmem:[%s1 + $0x9d0] sm:$0xff]
    %v354 = vld [vmem:[%s1 + $0x9d8] sm:$0xff]
    %v355 = vld [vmem:[%s1 + $0x9e0] sm:$0xff]
    %v356 = vld [vmem:[%s1 + $0x9e8] sm:$0xff]
    %v357 = vld [vmem:[%s1 + $0x9f0] sm:$0xff]
    %v358 = vld [vmem:[%s1 + $0x9f8] sm:$0xff]
    %v359 = vld [vmem:[%s1 + $0xa00] sm:$0xff]
    %v360 = vld [vmem:[%s1 + $0xa08] sm:$0xff]
    %v361 = vld [vmem:[%s1 + $0xa10] sm:$0xff]
    %v362 = vld [vmem:[%s1 + $0xa18] sm:$0xff]
    %v363 = vld [vmem:[%s1 + $0xa20] sm:$0xff]
    %v364 = vld [vmem:[%s1 + $0xa28] sm:$0xff]
    %v365 = vld [vmem:[%s1 + $0xa30] sm:$0xff]
    %v366 = vld [vmem:[%s1 + $0xa38] sm:$0xff]
    %v367 = vld [vmem:[%s1 + $0xa40] sm:$0xff]
    %v368 = vld [vmem:[%s1 + $0xa48] sm:$0xff]
    %v369 = vld [vmem:[%s1 + $0xa50] sm:$0xff]
    %v370 = vld [vmem:[%s1 + $0xa58] sm:$0xff]
    %v371 = vld [vmem:[%s1 + $0xa60] sm:$0xff]
    %v372 = vld [vmem:[%s1 + $0xa68] sm:$0xff]
    %v373 = vld [vmem:[%s1 + $0xa70] sm:$0xff]
    %v374 = vld [vmem:[%s1 + $0xa78] sm:$0xff]
    %v375 = vld [vmem:[%s1 + $0xa80] sm:$0xff]
    %v376 = vld [vmem:[%s1 + $0xa88] sm:$0xff]
    %v377 = vld [vmem:[%s1 + $0xa90] sm:$0xff]
    %v378 = vld [vmem:[%s1 + $0xa98] sm:$0xff]
    %v379 = vld [vmem:[%s1 + $0xaa0] sm:$0xff]
    %v380 = vld [vmem:[%s1 + $0xaa8] sm:$0xff]
    %v381 = vld [vmem:[%s1 + $0xab0] sm:$0xff]
    %v382 = vld [vmem:[%s1 + $0xab8] sm:$0xff]
    %v383 = vld [vmem:[%s1 + $0xac0] sm:$0xff]
    %v384 = vld [vmem:[%s1 + $0xac8] sm:$0xff]
    %v385 = vld [vmem:[%s1 + $0xad0] sm:$0xff]
    %v386 = vld [vmem:[%s1 + $0xad8] sm:$0xff]
    %v387 = vld [vmem:[%s1 + $0xae0] sm:$0xff]
    %v388 = vld [vmem:[%s1 + $0xae8] sm:$0xff]
    %v389 = vld [vmem:[%s1 + $0xaf0] sm:$0xff]
    %v390 = vld [vmem:[%s1 + $0xaf8] sm:$0xff]
    %v391 = vld [vmem:[%s1 + $0xb00] sm:$0xff]
    %v392 = vld [vmem:[%s1 + $0xb08] sm:$0xff]
    %v393 = vld [vmem:[%s1 + $0xb10] sm:$0xff]
    %v394 = vld [vmem:[%s1 + $0xb18] sm:$0xff]
    %v395 = vld [vmem:[%s1 + $0xb20] sm:$0xff]
    %v396 = vld [vmem:[%s1 + $0xb28] sm:$0xff]
    %v397 = vld [vmem:[%s1 + $0xb30] sm:$0xff]
    %v398 = vld [vmem:[%s1 + $0xb38] sm:$0xff]
    %v399 = vld [vmem:[%s1 + $0xb40] sm:$0xff]
    %v400 = vld [vmem:[%s1 + $0xb48] sm:$0xff]
    %v401 = vld [vmem:[%s1 + $0xb50] sm:$0xff]
    %v402 = vld [vmem:[%s1 + $0xb58] sm:$0xff]
    %v403 = vld [vmem:[%s1 + $0xb60] sm:$0xff]
    %v404 = vld [vmem:[%s1 + $0xb68] sm:$0xff]
    %v405 = vld [vmem:[%s1 + $0xb70] sm:$0xff]
    %v406 = vld [vmem:[%s1 + $0xb78] sm:$0xff]
    %v407 = vld [vmem:[%s1 + $0xb80] sm:$0xff]
    %v408 = vld [vmem:[%s1 + $0xb88] sm:$0xff]
    %v409 = vld [vmem:[%s1 + $0xb90] sm:$0xff]
    %v410 = vld [vmem:[%s1 + $0xb98] sm:$0xff]
    %v411 = vld [vmem:[%s1 + $0xba0] sm:$0xff]
    %v412 = vld [vmem:[%s1 + $0xba8] sm:$0xff]
    %v413 = vld [vmem:[%s1 + $0xbb0] sm:$0xff]
    %v414 = vld [vmem:[%s1 + $0xbb8] sm:$0xff]
    %v415 = vld [vmem:[%s1 + $0xbc0] sm:$0xff]
    %v416 = vld [vmem:[%s1 + $0xbc8] sm:$0xff]
    %v417 = vld [vmem:[%s1 + $0xbd0] sm:$0xff]
    %v418 = vld [vmem:[%s1 + $0xbd8] sm:$0xff]
    %v419 = vld [vmem:[%s1 + $0xbe0] sm:$0xff]
    %v420 = vld [vmem:[%s1 + $0xbe8] sm:$0xff]
    %v421 = vld [vmem:[%s1 + $0xbf0] sm:$0xff]
    %v422 = vld [vmem:[%s1 + $0xbf8] sm:$0xff]
    %v423 = vld [vmem:[%s1 + $0xc00] sm:$0xff]
    %v424 = vld [vmem:[%s1 + $0xc08] sm:$0xff]
    %v425 = vld [vmem:[%s1 + $0xc10] sm:$0xff]
    %v426 = vld [vmem:[%s1 + $0xc18] sm:$0xff]
    %v427 = vld [vmem:[%s1 + $0xc20] sm:$0xff]
    %v428 = vld [vmem:[%s1 + $0xc28] sm:$0xff]
    %v429 = vld [vmem:[%s1 + $0xc30] sm:$0xff]
    %v430 = vld [vmem:[%s1 + $0xc38] sm:$0xff]
    %v431 = vld [vmem:[%s1 + $0xc40] sm:$0xff]
    %v432 = vld [vmem:[%s1 + $0xc48] sm:$0xff]
    %v433 = vld [vmem:[%s1 + $0xc50] sm:$0xff]
    %v434 = vld [vmem:[%s1 + $0xc58] sm:$0xff]
    %v435 = vld [vmem:[%s1 + $0xc60] sm:$0xff]
    %v436 = vld [vmem:[%s1 + $0xc68] sm:$0xff]
    %v437 = vld [vmem:[%s1 + $0xc70] sm:$0xff]
    %v438 = vld [vmem:[%s1 + $0xc78] sm:$0xff]
    %v439 = vld [vmem:[%s1 + $0xc80] sm:$0xff]
    %v440 = vld [vmem:[%s1 + $0xc88] sm:$0xff]
    %v441 = vld [vmem:[%s1 + $0xc90] sm:$0xff]
    %v442 = vld [vmem:[%s1 + $0xc98] sm:$0xff]
    %v443 = vld [vmem:[%s1 + $0xca0] sm:$0xff]
    %v444 = vld [vmem:[%s1 + $0xca8] sm:$0xff]
    %v445 = vld [vmem:[%s1 + $0xcb0] sm:$0xff]
    %v446 = vld [vmem:[%s1 + $0xcb8] sm:$0xff]
    %v447 = vld [vmem:[%s1 + $0xcc0] sm:$0xff]
    %v448 = vld [vmem:[%s1 + $0xcc8] sm:$0xff]
    %v449 = vld [vmem:[%s1 + $0xcd0] sm:$0xff]
    %v450 = vld [vmem:[%s1 + $0xcd8] sm:$0xff]
    %v451 = vld [vmem:[%s1 + $0xce0] sm:$0xff]
    %v452 = vld [vmem:[%s1 + $0xce8] sm:$0xff]
    %v453 = vld [vmem:[%s1 + $0xcf0] sm:$0xff]
    %v454 = vld [vmem:[%s1 + $0xcf8] sm:$0xff]
    %v455 = vld [vmem:[%s1 + $0xd00] sm:$0xff]
    %v456 = vld [vmem:[%s1 + $0xd08] sm:$0xff]
    %v457 = vld [vmem:[%s1 + $0xd10] sm:$0xff]
    %v458 = vld [vmem:[%s1 + $0xd18] sm:$0xff]
    %v459 = vld [vmem:[%s1 + $0xd20] sm:$0xff]
    %v460 = vld [vmem:[%s1 + $0xd28] sm:$0xff]
    %v461 = vld [vmem:[%s1 + $0xd30] sm:$0xff]
    %v462 = vld [vmem:[%s1 + $0xd38] sm:$0xff]
    %v463 = vld [vmem:[%s1 + $0xd40] sm:$0xff]
    %v464 = vld [vmem:[%s1 + $0xd48] sm:$0xff]
    %v465 = vld [vmem:[%s1 + $0xd50] sm:$0xff]
    %v466 = vld [vmem:[%s1 + $0xd58] sm:$0xff]
    %v467 = vld [vmem:[%s1 + $0xd60] sm:$0xff]
    %v468 = vld [vmem:[%s1 + $0xd68] sm:$0xff]
    %v469 = vld [vmem:[%s1 + $0xd70] sm:$0xff]
    %v470 = vld [vmem:[%s1 + $0xd78] sm:$0xff]
    %v471 = vld [vmem:[%s1 + $0xd80] sm:$0xff]
    %v472 = vld [vmem:[%s1 + $0xd88] sm:$0xff]
    %v473 = vld [vmem:[%s1 + $0xd90] sm:$0xff]
    %v474 = vld [vmem:[%s1 + $0xd98] sm:$0xff]
    %v475 = vld [vmem:[%s1 + $0xda0] sm:$0xff]
    %v476 = vld [vmem:[%s1 + $0xda8] sm:$0xff]
    %v477 = vld [vmem:[%s1 + $0xdb0] sm:$0xff]
    %v478 = vld [vmem:[%s1 + $0xdb8] sm:$0xff]
    %v479 = vld [vmem:[%s1 + $0xdc0] sm:$0xff]
    %v480 = vld [vmem:[%s1 + $0xdc8] sm:$0xff]
    %v481 = vld [vmem:[%s1 + $0xdd0] sm:$0xff]
    %v482 = vld [vmem:[%s1 + $0xdd8] sm:$0xff]
    %v483 = vld [vmem:[%s1 + $0xde0] sm:$0xff]
    %v484 = vld [vmem:[%s1 + $0xde8] sm:$0xff]
    %v485 = vld [vmem:[%s1 + $0xdf0] sm:$0xff]
    %v486 = vld [vmem:[%s1 + $0xdf8] sm:$0xff]
    %v487 = vld [vmem:[%s1 + $0xe00] sm:$0xff]
    %v488 = vld [vmem:[%s1 + $0xe08] sm:$0xff]
    %v489 = vld [vmem:[%s1 + $0xe10] sm:$0xff]
    %v490 = vld [vmem:[%s1 + $0xe18] sm:$0xff]
    %v491 = vld [vmem:[%s1 + $0xe20] sm:$0xff]
    %v492 = vld [vmem:[%s1 + $0xe28] sm:$0xff]
    %v493 = vld [vmem:[%s1 + $0xe30] sm:$0xff]
    %v494 = vld [vmem:[%s1 + $0xe38] sm:$0xff]
    %v495 = vld [vmem:[%s1 + $0xe40] sm:$0xff]
    %v496 = vld [vmem:[%s1 + $0xe48] sm:$0xff]
    %v497 = vld [vmem:[%s1 + $0xe50] sm:$0xff]
    %v498 = vld [vmem:[%s1 + $0xe58] sm:$0xff]
    %v499 = vld [vmem:[%s1 + $0xe60] sm:$0xff]
    %v500 = vld [vmem:[%s1 + $0xe68] sm:$0xff]
    %v501 = vld [vmem:[%s1 + $0xe70] sm:$0xff]
    %v502 = vld [vmem:[%s1 + $0xe78] sm:$0xff]
    %v503 = vld [vmem:[%s1 + $0xe80] sm:$0xff]
    %v504 = vld [vmem:[%s1 + $0xe88] sm:$0xff]
    %v505 = vld [vmem:[%s1 + $0xe90] sm:$0xff]
    %v506 = vld [vmem:[%s1 + $0xe98] sm:$0xff]
    %v507 = vld [vmem:[%s1 + $0xea0] sm:$0xff]
    %v508 = vld [vmem:[%s1 + $0xea8] sm:$0xff]
    %v509 = vld [vmem:[%s1 + $0xeb0] sm:$0xff]
    %v510 = vld [vmem:[%s1 + $0xeb8] sm:$0xff]
    %v511 = vld [vmem:[%s1 + $0xec0] sm:$0xff]
    %v512 = vld [vmem:[%s1 + $0xec8] sm:$0xff]
    %v513 = vld [vmem:[%s1 + $0xed0] sm:$0xff]
    %v514 = vld [vmem:[%s1 + $0xed8] sm:$0xff]
    %v515 = vld [vmem:[%s1 + $0xee0] sm:$0xff]
    %v516 = vld [vmem:[%s1 + $0xee8] sm:$0xff]
    %v517 = vld [vmem:[%s1 + $0xef0] sm:$0xff]
    %v518 = vld [vmem:[%s1 + $0xef8] sm:$0xff]
    %v519 = vld [vmem:[%s1 + $0xf00] sm:$0xff]
    %v520 = vld [vmem:[%s1 + $0xf08] sm:$0xff]
    %v521 = vld [vmem:[%s1 + $0xf10] sm:$0xff]
    %v522 = vld [vmem:[%s1 + $0xf18] sm:$0xff]
    %v523 = vld [vmem:[%s1 + $0xf20] sm:$0xff]
    %v524 = vld [vmem:[%s1 + $0xf28] sm:$0xff]
    %v525 = vld [vmem:[%s1 + $0xf30] sm:$0xff]
    %v526 = vld [vmem:[%s1 + $0xf38] sm:$0xff]
    %v527 = vld [vmem:[%s1 + $0xf40] sm:$0xff]
    %v528 = vld [vmem:[%s1 + $0xf48] sm:$0xff]
    %v529 = vld [vmem:[%s1 + $0xf50] sm:$0xff]
    %v530 = vld [vmem:[%s1 + $0xf58] sm:$0xff]
    %v531 = vld [vmem:[%s1 + $0xf60] sm:$0xff]
    %v532 = vld [vmem:[%s1 + $0xf68] sm:$0xff]
    %v533 = vld [vmem:[%s1 + $0xf70] sm:$0xff]
    %v534 = vld [vmem:[%s1 + $0xf78] sm:$0xff]
    %v535 = vld [vmem:[%s1 + $0xf80] sm:$0xff]
    %v536 = vld [vmem:[%s1 + $0xf88] sm:$0xff]
    %v537 = vld [vmem:[%s1 + $0xf90] sm:$0xff]
    %v538 = vld [vmem:[%s1 + $0xf98] sm:$0xff]
    %v539 = vld [vmem:[%s1 + $0xfa0] sm:$0xff]
    %v540 = vld [vmem:[%s1 + $0xfa8] sm:$0xff]
    %v541 = vld [vmem:[%s1 + $0xfb0] sm:$0xff]
    %v542 = vld [vmem:[%s1 + $0xfb8] sm:$0xff]
    %v543 = vld [vmem:[%s1 + $0xfc0] sm:$0xff]
    %v544 = vld [vmem:[%s1 + $0xfc8] sm:$0xff]
    %v545 = vld [vmem:[%s1 + $0xfd0] sm:$0xff]
    %v546 = vld [vmem:[%s1 + $0xfd8] sm:$0xff]
    %v547 = vld [vmem:[%s1 + $0xfe0] sm:$0xff]
    %v548 = vld [vmem:[%s1 + $0xfe8] sm:$0xff]
    %v549 = vld [vmem:[%s1 + $0xff0] sm:$0xff]
    %v550 = vld [vmem:[%s1 + $0xff8] sm:$0xff]
    %v559 = vcombine.high %v30, %v30
    %v561 = vunpack.c.l.s4 1983009808
    %v562 = vunpack.c.0.s8 %v561
    %v563 = vlaneseq
    %v564 = vshrl.u32 %v563, 7
    %v565 = vsub.s32 %v562, %v564
    %v566 = vrot.slane %v30, %v565
    %v568 = vunpack.c.l.s4 1983009808
    %v569 = vunpack.c.0.s8 %v568
    %v570 = vlaneseq
    %v571 = vshrl.u32 %v570, 7
    %v572 = vsub.s32 %v569, %v571
    %v573 = vrot.slane %v559, %v572
    %v574 = vcombine.high %v566, %v566
    %v575 = vcombine.high %v573, %v573
    %v576 = vcombine.high %v31, %v31
    %v578 = vunpack.c.l.s4 1983009808
    %v579 = vunpack.c.0.s8 %v578
    %v580 = vlaneseq
    %v581 = vshrl.u32 %v580, 7
    %v582 = vsub.s32 %v579, %v581
    %v583 = vrot.slane %v31, %v582
    %v585 = vunpack.c.l.s4 1983009808
    %v586 = vunpack.c.0.s8 %v585
    %v587 = vlaneseq
    %v588 = vshrl.u32 %v587, 7
    %v589 = vsub.s32 %v586, %v588
    %v590 = vrot.slane %v576, %v589
    %v591 = vcombine.high %v583, %v583
    %v592 = vcombine.high %v590, %v590
    %v593 = vcombine.high %v32, %v32
    %v595 = vunpack.c.l.s4 1983009808
    %v596 = vunpack.c.0.s8 %v595
    %v597 = vlaneseq
    %v598 = vshrl.u32 %v597, 7
    %v599 = vsub.s32 %v596, %v598
    %v600 = vrot.slane %v32, %v599
    %v602 = vunpack.c.l.s4 1983009808
    %v603 = vunpack.c.0.s8 %v602
    %v604 = vlaneseq
    %v605 = vshrl.u32 %v604, 7
    %v606 = vsub.s32 %v603, %v605
    %v607 = vrot.slane %v593, %v606
    %v608 = vcombine.high %v600, %v600
    %v609 = vcombine.high %v607, %v607
    %v610 = vcombine.high %v33, %v33
    %v612 = vunpack.c.l.s4 1983009808
    %v613 = vunpack.c.0.s8 %v612
    %v614 = vlaneseq
    %v615 = vshrl.u32 %v614, 7
    %v616 = vsub.s32 %v613, %v615
    %v617 = vrot.slane %v33, %v616
    %v619 = vunpack.c.l.s4 1983009808
    %v620 = vunpack.c.0.s8 %v619
    %v621 = vlaneseq
    %v622 = vshrl.u32 %v621, 7
    %v623 = vsub.s32 %v620, %v622
    %v624 = vrot.slane %v610, %v623
    %v625 = vcombine.high %v617, %v617
    %v626 = vcombine.high %v624, %v624
    %v627 = vcombine.high %v34, %v34
    %v629 = vunpack.c.l.s4 1983009808
    %v630 = vunpack.c.0.s8 %v629
    %v631 = vlaneseq
    %v632 = vshrl.u32 %v631, 7
    %v633 = vsub.s32 %v630, %v632
    %v634 = vrot.slane %v34, %v633
    %v636 = vunpack.c.l.s4 1983009808
    %v637 = vunpack.c.0.s8 %v636
    %v638 = vlaneseq
    %v639 = vshrl.u32 %v638, 7
    %v640 = vsub.s32 %v637, %v639
    %v641 = vrot.slane %v627, %v640
    %v642 = vcombine.high %v634, %v634
    %v643 = vcombine.high %v641, %v641
    %v644 = vcombine.high %v35, %v35
    %v646 = vunpack.c.l.s4 1983009808
    %v647 = vunpack.c.0.s8 %v646
    %v648 = vlaneseq
    %v649 = vshrl.u32 %v648, 7
    %v650 = vsub.s32 %v647, %v649
    %v651 = vrot.slane %v35, %v650
    %v653 = vunpack.c.l.s4 1983009808
    %v654 = vunpack.c.0.s8 %v653
    %v655 = vlaneseq
    %v656 = vshrl.u32 %v655, 7
    %v657 = vsub.s32 %v654, %v656
    %v658 = vrot.slane %v644, %v657
    %v659 = vcombine.high %v651, %v651
    %v660 = vcombine.high %v658, %v658
    %v661 = vcombine.high %v36, %v36
    %v663 = vunpack.c.l.s4 1983009808
    %v664 = vunpack.c.0.s8 %v663
    %v665 = vlaneseq
    %v666 = vshrl.u32 %v665, 7
    %v667 = vsub.s32 %v664, %v666
    %v668 = vrot.slane %v36, %v667
    %v670 = vunpack.c.l.s4 1983009808
    %v671 = vunpack.c.0.s8 %v670
    %v672 = vlaneseq
    %v673 = vshrl.u32 %v672, 7
    %v674 = vsub.s32 %v671, %v673
    %v675 = vrot.slane %v661, %v674
    %v676 = vcombine.high %v668, %v668
    %v677 = vcombine.high %v675, %v675
    %v678 = vcombine.high %v37, %v37
    %v680 = vunpack.c.l.s4 1983009808
    %v681 = vunpack.c.0.s8 %v680
    %v682 = vlaneseq
    %v683 = vshrl.u32 %v682, 7
    %v684 = vsub.s32 %v681, %v683
    %v685 = vrot.slane %v37, %v684
    %v687 = vunpack.c.l.s4 1983009808
    %v688 = vunpack.c.0.s8 %v687
    %v689 = vlaneseq
    %v690 = vshrl.u32 %v689, 7
    %v691 = vsub.s32 %v688, %v690
    %v692 = vrot.slane %v678, %v691
    %v693 = vcombine.high %v685, %v685
    %v694 = vcombine.high %v692, %v692
    %727 = vmatprep.subr.mxu0 0.0
    %728 = vmatpush1.msra.mxu0 %v54
    %729 = vmatprep.subr.mxu0 0.0
    %730 = vmatpush1.msra.mxu0 %v53
    %731 = vmatprep.subr.mxu0 0.0
    %732 = vmatpush1.msra.mxu0 %v52
    %733 = vmatprep.subr.mxu0 0.0
    %734 = vmatpush1.msra.mxu0 %v51
    %735 = vmatprep.subr.mxu0 0.0
    %736 = vmatpush1.msra.mxu0 %v50
    %737 = vmatprep.subr.mxu0 0.0
    %738 = vmatpush1.msra.mxu0 %v49
    %739 = vmatprep.subr.mxu0 0.0
    %740 = vmatpush1.msra.mxu0 %v48
    %741 = vmatprep.subr.mxu0 0.0
    %742 = vmatpush1.msra.mxu0 %v47
    %743 = vmatprep.subr.mxu0 0.0
    %744 = vmatpush1.msra.mxu0 %v46
    %745 = vmatprep.subr.mxu0 0.0
    %746 = vmatpush1.msra.mxu0 %v45
    %747 = vmatprep.subr.mxu0 0.0
    %748 = vmatpush1.msra.mxu0 %v44
    %749 = vmatprep.subr.mxu0 0.0
    %750 = vmatpush1.msra.mxu0 %v43
    %751 = vmatprep.subr.mxu0 0.0
    %752 = vmatpush1.msra.mxu0 %v42
    %753 = vmatprep.subr.mxu0 0.0
    %754 = vmatpush1.msra.mxu0 %v41
    %755 = vmatprep.subr.mxu0 0.0
    %756 = vmatpush1.msra.mxu0 %v40
    %757 = vmatprep.subr.mxu0 0.0
    %758 = vmatpush1.msra.mxu0 %v39
    %759 = vmatprep.subr.mxu0 0.0
    %760 = vmatpush2.msra.mxu0 %v70
    %761 = vmatprep.subr.mxu0 0.0
    %762 = vmatpush2.msra.mxu0 %v69
    %763 = vmatprep.subr.mxu0 0.0
    %764 = vmatpush2.msra.mxu0 %v68
    %765 = vmatprep.subr.mxu0 0.0
    %766 = vmatpush2.msra.mxu0 %v67
    %767 = vmatprep.subr.mxu0 0.0
    %768 = vmatpush2.msra.mxu0 %v66
    %769 = vmatprep.subr.mxu0 0.0
    %770 = vmatpush2.msra.mxu0 %v65
    %771 = vmatprep.subr.mxu0 0.0
    %772 = vmatpush2.msra.mxu0 %v64
    %773 = vmatprep.subr.mxu0 0.0
    %774 = vmatpush2.msra.mxu0 %v63
    %775 = vmatprep.subr.mxu0 0.0
    %776 = vmatpush2.msra.mxu0 %v62
    %777 = vmatprep.subr.mxu0 0.0
    %778 = vmatpush2.msra.mxu0 %v61
    %779 = vmatprep.subr.mxu0 0.0
    %780 = vmatpush2.msra.mxu0 %v60
    %781 = vmatprep.subr.mxu0 0.0
    %782 = vmatpush2.msra.mxu0 %v59
    %783 = vmatprep.subr.mxu0 0.0
    %784 = vmatpush2.msra.mxu0 %v58
    %785 = vmatprep.subr.mxu0 0.0
    %786 = vmatpush2.msra.mxu0 %v57
    %787 = vmatprep.subr.mxu0 0.0
    %788 = vmatpush2.msra.mxu0 %v56
    %789 = vmatprep.subr.mxu0 0.0
    %790 = vmatpush2.msra.mxu0 %v55
    %791 = vmatprep.mubr.f32.mxu0 %v574
    %792 = vmatmul.mubr.f32.gmra.mxu0 %v566
    %v793 = vpop.f32.mrf.mxu0
    %v794 = vadd.f32 0.0, %v793
    %v795 = vpop.f32.mrf.mxu0
    %796 = vdwg.mxu0
    %797 = vmatprep.subr.mxu0 0.0
    %798 = vmatpush1.msra.mxu0 %v86
    %799 = vmatprep.subr.mxu0 0.0
    %800 = vmatpush1.msra.mxu0 %v85
    %801 = vmatprep.subr.mxu0 0.0
    %802 = vmatpush1.msra.mxu0 %v84
    %803 = vmatprep.subr.mxu0 0.0
    %804 = vmatpush1.msra.mxu0 %v83
    %805 = vmatprep.subr.mxu0 0.0
    %806 = vmatpush1.msra.mxu0 %v82
    %807 = vmatprep.subr.mxu0 0.0
    %808 = vmatpush1.msra.mxu0 %v81
    %809 = vmatprep.subr.mxu0 0.0
    %810 = vmatpush1.msra.mxu0 %v80
    %811 = vmatprep.subr.mxu0 0.0
    %812 = vmatpush1.msra.mxu0 %v79
    %813 = vmatprep.subr.mxu0 0.0
    %814 = vmatpush1.msra.mxu0 %v78
    %815 = vmatprep.subr.mxu0 0.0
    %816 = vmatpush1.msra.mxu0 %v77
    %817 = vmatprep.subr.mxu0 0.0
    %818 = vmatpush1.msra.mxu0 %v76
    %819 = vmatprep.subr.mxu0 0.0
    %820 = vmatpush1.msra.mxu0 %v75
    %821 = vmatprep.subr.mxu0 0.0
    %822 = vmatpush1.msra.mxu0 %v74
    %823 = vmatprep.subr.mxu0 0.0
    %824 = vmatpush1.msra.mxu0 %v73
    %825 = vmatprep.subr.mxu0 0.0
    %826 = vmatpush1.msra.mxu0 %v72
    %827 = vmatprep.subr.mxu0 0.0
    %828 = vmatpush1.msra.mxu0 %v71
    %829 = vmatprep.subr.mxu0 0.0
    %830 = vmatpush2.msra.mxu0 %v102
    %831 = vmatprep.subr.mxu0 0.0
    %832 = vmatpush2.msra.mxu0 %v101
    %833 = vmatprep.subr.mxu0 0.0
    %834 = vmatpush2.msra.mxu0 %v100
    %835 = vmatprep.subr.mxu0 0.0
    %836 = vmatpush2.msra.mxu0 %v99
    %837 = vmatprep.subr.mxu0 0.0
    %838 = vmatpush2.msra.mxu0 %v98
    %839 = vmatprep.subr.mxu0 0.0
    %840 = vmatpush2.msra.mxu0 %v97
    %841 = vmatprep.subr.mxu0 0.0
    %842 = vmatpush2.msra.mxu0 %v96
    %843 = vmatprep.subr.mxu0 0.0
    %844 = vmatpush2.msra.mxu0 %v95
    %845 = vmatprep.subr.mxu0 0.0
    %846 = vmatpush2.msra.mxu0 %v94
    %847 = vmatprep.subr.mxu0 0.0
    %848 = vmatpush2.msra.mxu0 %v93
    %849 = vmatprep.subr.mxu0 0.0
    %850 = vmatpush2.msra.mxu0 %v92
    %851 = vmatprep.subr.mxu0 0.0
    %852 = vmatpush2.msra.mxu0 %v91
    %853 = vmatprep.subr.mxu0 0.0
    %854 = vmatpush2.msra.mxu0 %v90
    %855 = vmatprep.subr.mxu0 0.0
    %856 = vmatpush2.msra.mxu0 %v89
    %857 = vmatprep.subr.mxu0 0.0
    %858 = vmatpush2.msra.mxu0 %v88
    %859 = vmatprep.subr.mxu0 0.0
    %860 = vmatpush2.msra.mxu0 %v87
    %861 = vmatprep.mubr.f32.mxu0 %v575
    %862 = vmatmul.mubr.f32.gmra.mxu0 %v573
    %v863 = vpop.f32.mrf.mxu0
    %v864 = vadd.f32 %v794, %v863
    %v865 = vpop.f32.mrf.mxu0
    %866 = vdwg.mxu0
    %867 = vmatprep.subr.mxu0 0.0
    %868 = vmatpush1.msra.mxu0 %v118
    %869 = vmatprep.subr.mxu0 0.0
    %870 = vmatpush1.msra.mxu0 %v117
    %871 = vmatprep.subr.mxu0 0.0
    %872 = vmatpush1.msra.mxu0 %v116
    %873 = vmatprep.subr.mxu0 0.0
    %874 = vmatpush1.msra.mxu0 %v115
    %875 = vmatprep.subr.mxu0 0.0
    %876 = vmatpush1.msra.mxu0 %v114
    %877 = vmatprep.subr.mxu0 0.0
    %878 = vmatpush1.msra.mxu0 %v113
    %879 = vmatprep.subr.mxu0 0.0
    %880 = vmatpush1.msra.mxu0 %v112
    %881 = vmatprep.subr.mxu0 0.0
    %882 = vmatpush1.msra.mxu0 %v111
    %883 = vmatprep.subr.mxu0 0.0
    %884 = vmatpush1.msra.mxu0 %v110
    %885 = vmatprep.subr.mxu0 0.0
    %886 = vmatpush1.msra.mxu0 %v109
    %887 = vmatprep.subr.mxu0 0.0
    %888 = vmatpush1.msra.mxu0 %v108
    %889 = vmatprep.subr.mxu0 0.0
    %890 = vmatpush1.msra.mxu0 %v107
    %891 = vmatprep.subr.mxu0 0.0
    %892 = vmatpush1.msra.mxu0 %v106
    %893 = vmatprep.subr.mxu0 0.0
    %894 = vmatpush1.msra.mxu0 %v105
    %895 = vmatprep.subr.mxu0 0.0
    %896 = vmatpush1.msra.mxu0 %v104
    %897 = vmatprep.subr.mxu0 0.0
    %898 = vmatpush1.msra.mxu0 %v103
    %899 = vmatprep.subr.mxu0 0.0
    %900 = vmatpush2.msra.mxu0 %v134
    %901 = vmatprep.subr.mxu0 0.0
    %902 = vmatpush2.msra.mxu0 %v133
    %903 = vmatprep.subr.mxu0 0.0
    %904 = vmatpush2.msra.mxu0 %v132
    %905 = vmatprep.subr.mxu0 0.0
    %906 = vmatpush2.msra.mxu0 %v131
    %907 = vmatprep.subr.mxu0 0.0
    %908 = vmatpush2.msra.mxu0 %v130
    %909 = vmatprep.subr.mxu0 0.0
    %910 = vmatpush2.msra.mxu0 %v129
    %911 = vmatprep.subr.mxu0 0.0
    %912 = vmatpush2.msra.mxu0 %v128
    %913 = vmatprep.subr.mxu0 0.0
    %914 = vmatpush2.msra.mxu0 %v127
    %915 = vmatprep.subr.mxu0 0.0
    %916 = vmatpush2.msra.mxu0 %v126
    %917 = vmatprep.subr.mxu0 0.0
    %918 = vmatpush2.msra.mxu0 %v125
    %919 = vmatprep.subr.mxu0 0.0
    %920 = vmatpush2.msra.mxu0 %v124
    %921 = vmatprep.subr.mxu0 0.0
    %922 = vmatpush2.msra.mxu0 %v123
    %923 = vmatprep.subr.mxu0 0.0
    %924 = vmatpush2.msra.mxu0 %v122
    %925 = vmatprep.subr.mxu0 0.0
    %926 = vmatpush2.msra.mxu0 %v121
    %927 = vmatprep.subr.mxu0 0.0
    %928 = vmatpush2.msra.mxu0 %v120
    %929 = vmatprep.subr.mxu0 0.0
    %930 = vmatpush2.msra.mxu0 %v119
    %931 = vmatprep.mubr.f32.mxu0 %v591
    %932 = vmatmul.mubr.f32.gmra.mxu0 %v583
    %v933 = vpop.f32.mrf.mxu0
    %v934 = vadd.f32 %v864, %v933
    %v935 = vpop.f32.mrf.mxu0
    %936 = vdwg.mxu0
    %937 = vmatprep.subr.mxu0 0.0
    %938 = vmatpush1.msra.mxu0 %v150
    %939 = vmatprep.subr.mxu0 0.0
    %940 = vmatpush1.msra.mxu0 %v149
    %941 = vmatprep.subr.mxu0 0.0
    %942 = vmatpush1.msra.mxu0 %v148
    %943 = vmatprep.subr.mxu0 0.0
    %944 = vmatpush1.msra.mxu0 %v147
    %945 = vmatprep.subr.mxu0 0.0
    %946 = vmatpush1.msra.mxu0 %v146
    %947 = vmatprep.subr.mxu0 0.0
    %948 = vmatpush1.msra.mxu0 %v145
    %949 = vmatprep.subr.mxu0 0.0
    %950 = vmatpush1.msra.mxu0 %v144
    %951 = vmatprep.subr.mxu0 0.0
    %952 = vmatpush1.msra.mxu0 %v143
    %953 = vmatprep.subr.mxu0 0.0
    %954 = vmatpush1.msra.mxu0 %v142
    %955 = vmatprep.subr.mxu0 0.0
    %956 = vmatpush1.msra.mxu0 %v141
    %957 = vmatprep.subr.mxu0 0.0
    %958 = vmatpush1.msra.mxu0 %v140
    %959 = vmatprep.subr.mxu0 0.0
    %960 = vmatpush1.msra.mxu0 %v139
    %961 = vmatprep.subr.mxu0 0.0
    %962 = vmatpush1.msra.mxu0 %v138
    %963 = vmatprep.subr.mxu0 0.0
    %964 = vmatpush1.msra.mxu0 %v137
    %965 = vmatprep.subr.mxu0 0.0
    %966 = vmatpush1.msra.mxu0 %v136
    %967 = vmatprep.subr.mxu0 0.0
    %968 = vmatpush1.msra.mxu0 %v135
    %969 = vmatprep.subr.mxu0 0.0
    %970 = vmatpush2.msra.mxu0 %v166
    %971 = vmatprep.subr.mxu0 0.0
    %972 = vmatpush2.msra.mxu0 %v165
    %973 = vmatprep.subr.mxu0 0.0
    %974 = vmatpush2.msra.mxu0 %v164
    %975 = vmatprep.subr.mxu0 0.0
    %976 = vmatpush2.msra.mxu0 %v163
    %977 = vmatprep.subr.mxu0 0.0
    %978 = vmatpush2.msra.mxu0 %v162
    %979 = vmatprep.subr.mxu0 0.0
    %980 = vmatpush2.msra.mxu0 %v161
    %981 = vmatprep.subr.mxu0 0.0
    %982 = vmatpush2.msra.mxu0 %v160
    %983 = vmatprep.subr.mxu0 0.0
    %984 = vmatpush2.msra.mxu0 %v159
    %985 = vmatprep.subr.mxu0 0.0
    %986 = vmatpush2.msra.mxu0 %v158
    %987 = vmatprep.subr.mxu0 0.0
    %988 = vmatpush2.msra.mxu0 %v157
    %989 = vmatprep.subr.mxu0 0.0
    %990 = vmatpush2.msra.mxu0 %v156
    %991 = vmatprep.subr.mxu0 0.0
    %992 = vmatpush2.msra.mxu0 %v155
    %993 = vmatprep.subr.mxu0 0.0
    %994 = vmatpush2.msra.mxu0 %v154
    %995 = vmatprep.subr.mxu0 0.0
    %996 = vmatpush2.msra.mxu0 %v153
    %997 = vmatprep.subr.mxu0 0.0
    %998 = vmatpush2.msra.mxu0 %v152
    %999 = vmatprep.subr.mxu0 0.0
    %1000 = vmatpush2.msra.mxu0 %v151
    %1001 = vmatprep.mubr.f32.mxu0 %v592
    %1002 = vmatmul.mubr.f32.gmra.mxu0 %v590
    %v1003 = vpop.f32.mrf.mxu0
    %v1004 = vadd.f32 %v934, %v1003
    %v1005 = vpop.f32.mrf.mxu0
    %1006 = vdwg.mxu0
    %1007 = vmatprep.subr.mxu0 0.0
    %1008 = vmatpush1.msra.mxu0 %v182
    %1009 = vmatprep.subr.mxu0 0.0
    %1010 = vmatpush1.msra.mxu0 %v181
    %1011 = vmatprep.subr.mxu0 0.0
    %1012 = vmatpush1.msra.mxu0 %v180
    %1013 = vmatprep.subr.mxu0 0.0
    %1014 = vmatpush1.msra.mxu0 %v179
    %1015 = vmatprep.subr.mxu0 0.0
    %1016 = vmatpush1.msra.mxu0 %v178
    %1017 = vmatprep.subr.mxu0 0.0
    %1018 = vmatpush1.msra.mxu0 %v177
    %1019 = vmatprep.subr.mxu0 0.0
    %1020 = vmatpush1.msra.mxu0 %v176
    %1021 = vmatprep.subr.mxu0 0.0
    %1022 = vmatpush1.msra.mxu0 %v175
    %1023 = vmatprep.subr.mxu0 0.0
    %1024 = vmatpush1.msra.mxu0 %v174
    %1025 = vmatprep.subr.mxu0 0.0
    %1026 = vmatpush1.msra.mxu0 %v173
    %1027 = vmatprep.subr.mxu0 0.0
    %1028 = vmatpush1.msra.mxu0 %v172
    %1029 = vmatprep.subr.mxu0 0.0
    %1030 = vmatpush1.msra.mxu0 %v171
    %1031 = vmatprep.subr.mxu0 0.0
    %1032 = vmatpush1.msra.mxu0 %v170
    %1033 = vmatprep.subr.mxu0 0.0
    %1034 = vmatpush1.msra.mxu0 %v169
    %1035 = vmatprep.subr.mxu0 0.0
    %1036 = vmatpush1.msra.mxu0 %v168
    %1037 = vmatprep.subr.mxu0 0.0
    %1038 = vmatpush1.msra.mxu0 %v167
    %1039 = vmatprep.subr.mxu0 0.0
    %1040 = vmatpush2.msra.mxu0 %v198
    %1041 = vmatprep.subr.mxu0 0.0
    %1042 = vmatpush2.msra.mxu0 %v197
    %1043 = vmatprep.subr.mxu0 0.0
    %1044 = vmatpush2.msra.mxu0 %v196
    %1045 = vmatprep.subr.mxu0 0.0
    %1046 = vmatpush2.msra.mxu0 %v195
    %1047 = vmatprep.subr.mxu0 0.0
    %1048 = vmatpush2.msra.mxu0 %v194
    %1049 = vmatprep.subr.mxu0 0.0
    %1050 = vmatpush2.msra.mxu0 %v193
    %1051 = vmatprep.subr.mxu0 0.0
    %1052 = vmatpush2.msra.mxu0 %v192
    %1053 = vmatprep.subr.mxu0 0.0
    %1054 = vmatpush2.msra.mxu0 %v191
    %1055 = vmatprep.subr.mxu0 0.0
    %1056 = vmatpush2.msra.mxu0 %v190
    %1057 = vmatprep.subr.mxu0 0.0
    %1058 = vmatpush2.msra.mxu0 %v189
    %1059 = vmatprep.subr.mxu0 0.0
    %1060 = vmatpush2.msra.mxu0 %v188
    %1061 = vmatprep.subr.mxu0 0.0
    %1062 = vmatpush2.msra.mxu0 %v187
    %1063 = vmatprep.subr.mxu0 0.0
    %1064 = vmatpush2.msra.mxu0 %v186
    %1065 = vmatprep.subr.mxu0 0.0
    %1066 = vmatpush2.msra.mxu0 %v185
    %1067 = vmatprep.subr.mxu0 0.0
    %1068 = vmatpush2.msra.mxu0 %v184
    %1069 = vmatprep.subr.mxu0 0.0
    %1070 = vmatpush2.msra.mxu0 %v183
    %1071 = vmatprep.mubr.f32.mxu0 %v608
    %1072 = vmatmul.mubr.f32.gmra.mxu0 %v600
    %v1073 = vpop.f32.mrf.mxu0
    %v1074 = vadd.f32 %v1004, %v1073
    %v1075 = vpop.f32.mrf.mxu0
    %1076 = vdwg.mxu0
    %1077 = vmatprep.subr.mxu0 0.0
    %1078 = vmatpush1.msra.mxu0 %v214
    %1079 = vmatprep.subr.mxu0 0.0
    %1080 = vmatpush1.msra.mxu0 %v213
    %1081 = vmatprep.subr.mxu0 0.0
    %1082 = vmatpush1.msra.mxu0 %v212
    %1083 = vmatprep.subr.mxu0 0.0
    %1084 = vmatpush1.msra.mxu0 %v211
    %1085 = vmatprep.subr.mxu0 0.0
    %1086 = vmatpush1.msra.mxu0 %v210
    %1087 = vmatprep.subr.mxu0 0.0
    %1088 = vmatpush1.msra.mxu0 %v209
    %1089 = vmatprep.subr.mxu0 0.0
    %1090 = vmatpush1.msra.mxu0 %v208
    %1091 = vmatprep.subr.mxu0 0.0
    %1092 = vmatpush1.msra.mxu0 %v207
    %1093 = vmatprep.subr.mxu0 0.0
    %1094 = vmatpush1.msra.mxu0 %v206
    %1095 = vmatprep.subr.mxu0 0.0
    %1096 = vmatpush1.msra.mxu0 %v205
    %1097 = vmatprep.subr.mxu0 0.0
    %1098 = vmatpush1.msra.mxu0 %v204
    %1099 = vmatprep.subr.mxu0 0.0
    %1100 = vmatpush1.msra.mxu0 %v203
    %1101 = vmatprep.subr.mxu0 0.0
    %1102 = vmatpush1.msra.mxu0 %v202
    %1103 = vmatprep.subr.mxu0 0.0
    %1104 = vmatpush1.msra.mxu0 %v201
    %1105 = vmatprep.subr.mxu0 0.0
    %1106 = vmatpush1.msra.mxu0 %v200
    %1107 = vmatprep.subr.mxu0 0.0
    %1108 = vmatpush1.msra.mxu0 %v199
    %1109 = vmatprep.subr.mxu0 0.0
    %1110 = vmatpush2.msra.mxu0 %v230
    %1111 = vmatprep.subr.mxu0 0.0
    %1112 = vmatpush2.msra.mxu0 %v229
    %1113 = vmatprep.subr.mxu0 0.0
    %1114 = vmatpush2.msra.mxu0 %v228
    %1115 = vmatprep.subr.mxu0 0.0
    %1116 = vmatpush2.msra.mxu0 %v227
    %1117 = vmatprep.subr.mxu0 0.0
    %1118 = vmatpush2.msra.mxu0 %v226
    %1119 = vmatprep.subr.mxu0 0.0
    %1120 = vmatpush2.msra.mxu0 %v225
    %1121 = vmatprep.subr.mxu0 0.0
    %1122 = vmatpush2.msra.mxu0 %v224
    %1123 = vmatprep.subr.mxu0 0.0
    %1124 = vmatpush2.msra.mxu0 %v223
    %1125 = vmatprep.subr.mxu0 0.0
    %1126 = vmatpush2.msra.mxu0 %v222
    %1127 = vmatprep.subr.mxu0 0.0
    %1128 = vmatpush2.msra.mxu0 %v221
    %1129 = vmatprep.subr.mxu0 0.0
    %1130 = vmatpush2.msra.mxu0 %v220
    %1131 = vmatprep.subr.mxu0 0.0
    %1132 = vmatpush2.msra.mxu0 %v219
    %1133 = vmatprep.subr.mxu0 0.0
    %1134 = vmatpush2.msra.mxu0 %v218
    %1135 = vmatprep.subr.mxu0 0.0
    %1136 = vmatpush2.msra.mxu0 %v217
    %1137 = vmatprep.subr.mxu0 0.0
    %1138 = vmatpush2.msra.mxu0 %v216
    %1139 = vmatprep.subr.mxu0 0.0
    %1140 = vmatpush2.msra.mxu0 %v215
    %1141 = vmatprep.mubr.f32.mxu0 %v609
    %1142 = vmatmul.mubr.f32.gmra.mxu0 %v607
    %v1143 = vpop.f32.mrf.mxu0
    %v1144 = vadd.f32 %v1074, %v1143
    %v1145 = vpop.f32.mrf.mxu0
    %1146 = vdwg.mxu0
    %1147 = vmatprep.subr.mxu0 0.0
    %1148 = vmatpush1.msra.mxu0 %v246
    %1149 = vmatprep.subr.mxu0 0.0
    %1150 = vmatpush1.msra.mxu0 %v245
    %1151 = vmatprep.subr.mxu0 0.0
    %1152 = vmatpush1.msra.mxu0 %v244
    %1153 = vmatprep.subr.mxu0 0.0
    %1154 = vmatpush1.msra.mxu0 %v243
    %1155 = vmatprep.subr.mxu0 0.0
    %1156 = vmatpush1.msra.mxu0 %v242
    %1157 = vmatprep.subr.mxu0 0.0
    %1158 = vmatpush1.msra.mxu0 %v241
    %1159 = vmatprep.subr.mxu0 0.0
    %1160 = vmatpush1.msra.mxu0 %v240
    %1161 = vmatprep.subr.mxu0 0.0
    %1162 = vmatpush1.msra.mxu0 %v239
    %1163 = vmatprep.subr.mxu0 0.0
    %1164 = vmatpush1.msra.mxu0 %v238
    %1165 = vmatprep.subr.mxu0 0.0
    %1166 = vmatpush1.msra.mxu0 %v237
    %1167 = vmatprep.subr.mxu0 0.0
    %1168 = vmatpush1.msra.mxu0 %v236
    %1169 = vmatprep.subr.mxu0 0.0
    %1170 = vmatpush1.msra.mxu0 %v235
    %1171 = vmatprep.subr.mxu0 0.0
    %1172 = vmatpush1.msra.mxu0 %v234
    %1173 = vmatprep.subr.mxu0 0.0
    %1174 = vmatpush1.msra.mxu0 %v233
    %1175 = vmatprep.subr.mxu0 0.0
    %1176 = vmatpush1.msra.mxu0 %v232
    %1177 = vmatprep.subr.mxu0 0.0
    %1178 = vmatpush1.msra.mxu0 %v231
    %1179 = vmatprep.subr.mxu0 0.0
    %1180 = vmatpush2.msra.mxu0 %v262
    %1181 = vmatprep.subr.mxu0 0.0
    %1182 = vmatpush2.msra.mxu0 %v261
    %1183 = vmatprep.subr.mxu0 0.0
    %1184 = vmatpush2.msra.mxu0 %v260
    %1185 = vmatprep.subr.mxu0 0.0
    %1186 = vmatpush2.msra.mxu0 %v259
    %1187 = vmatprep.subr.mxu0 0.0
    %1188 = vmatpush2.msra.mxu0 %v258
    %1189 = vmatprep.subr.mxu0 0.0
    %1190 = vmatpush2.msra.mxu0 %v257
    %1191 = vmatprep.subr.mxu0 0.0
    %1192 = vmatpush2.msra.mxu0 %v256
    %1193 = vmatprep.subr.mxu0 0.0
    %1194 = vmatpush2.msra.mxu0 %v255
    %1195 = vmatprep.subr.mxu0 0.0
    %1196 = vmatpush2.msra.mxu0 %v254
    %1197 = vmatprep.subr.mxu0 0.0
    %1198 = vmatpush2.msra.mxu0 %v253
    %1199 = vmatprep.subr.mxu0 0.0
    %1200 = vmatpush2.msra.mxu0 %v252
    %1201 = vmatprep.subr.mxu0 0.0
    %1202 = vmatpush2.msra.mxu0 %v251
    %1203 = vmatprep.subr.mxu0 0.0
    %1204 = vmatpush2.msra.mxu0 %v250
    %1205 = vmatprep.subr.mxu0 0.0
    %1206 = vmatpush2.msra.mxu0 %v249
    %1207 = vmatprep.subr.mxu0 0.0
    %1208 = vmatpush2.msra.mxu0 %v248
    %1209 = vmatprep.subr.mxu0 0.0
    %1210 = vmatpush2.msra.mxu0 %v247
    %1211 = vmatprep.mubr.f32.mxu0 %v625
    %1212 = vmatmul.mubr.f32.gmra.mxu0 %v617
    %v1213 = vpop.f32.mrf.mxu0
    %v1214 = vadd.f32 %v1144, %v1213
    %v1215 = vpop.f32.mrf.mxu0
    %1216 = vdwg.mxu0
    %1217 = vmatprep.subr.mxu0 0.0
    %1218 = vmatpush1.msra.mxu0 %v278
    %1219 = vmatprep.subr.mxu0 0.0
    %1220 = vmatpush1.msra.mxu0 %v277
    %1221 = vmatprep.subr.mxu0 0.0
    %1222 = vmatpush1.msra.mxu0 %v276
    %1223 = vmatprep.subr.mxu0 0.0
    %1224 = vmatpush1.msra.mxu0 %v275
    %1225 = vmatprep.subr.mxu0 0.0
    %1226 = vmatpush1.msra.mxu0 %v274
    %1227 = vmatprep.subr.mxu0 0.0
    %1228 = vmatpush1.msra.mxu0 %v273
    %1229 = vmatprep.subr.mxu0 0.0
    %1230 = vmatpush1.msra.mxu0 %v272
    %1231 = vmatprep.subr.mxu0 0.0
    %1232 = vmatpush1.msra.mxu0 %v271
    %1233 = vmatprep.subr.mxu0 0.0
    %1234 = vmatpush1.msra.mxu0 %v270
    %1235 = vmatprep.subr.mxu0 0.0
    %1236 = vmatpush1.msra.mxu0 %v269
    %1237 = vmatprep.subr.mxu0 0.0
    %1238 = vmatpush1.msra.mxu0 %v268
    %1239 = vmatprep.subr.mxu0 0.0
    %1240 = vmatpush1.msra.mxu0 %v267
    %1241 = vmatprep.subr.mxu0 0.0
    %1242 = vmatpush1.msra.mxu0 %v266
    %1243 = vmatprep.subr.mxu0 0.0
    %1244 = vmatpush1.msra.mxu0 %v265
    %1245 = vmatprep.subr.mxu0 0.0
    %1246 = vmatpush1.msra.mxu0 %v264
    %1247 = vmatprep.subr.mxu0 0.0
    %1248 = vmatpush1.msra.mxu0 %v263
    %1249 = vmatprep.subr.mxu0 0.0
    %1250 = vmatpush2.msra.mxu0 %v294
    %1251 = vmatprep.subr.mxu0 0.0
    %1252 = vmatpush2.msra.mxu0 %v293
    %1253 = vmatprep.subr.mxu0 0.0
    %1254 = vmatpush2.msra.mxu0 %v292
    %1255 = vmatprep.subr.mxu0 0.0
    %1256 = vmatpush2.msra.mxu0 %v291
    %1257 = vmatprep.subr.mxu0 0.0
    %1258 = vmatpush2.msra.mxu0 %v290
    %1259 = vmatprep.subr.mxu0 0.0
    %1260 = vmatpush2.msra.mxu0 %v289
    %1261 = vmatprep.subr.mxu0 0.0
    %1262 = vmatpush2.msra.mxu0 %v288
    %1263 = vmatprep.subr.mxu0 0.0
    %1264 = vmatpush2.msra.mxu0 %v287
    %1265 = vmatprep.subr.mxu0 0.0
    %1266 = vmatpush2.msra.mxu0 %v286
    %1267 = vmatprep.subr.mxu0 0.0
    %1268 = vmatpush2.msra.mxu0 %v285
    %1269 = vmatprep.subr.mxu0 0.0
    %1270 = vmatpush2.msra.mxu0 %v284
    %1271 = vmatprep.subr.mxu0 0.0
    %1272 = vmatpush2.msra.mxu0 %v283
    %1273 = vmatprep.subr.mxu0 0.0
    %1274 = vmatpush2.msra.mxu0 %v282
    %1275 = vmatprep.subr.mxu0 0.0
    %1276 = vmatpush2.msra.mxu0 %v281
    %1277 = vmatprep.subr.mxu0 0.0
    %1278 = vmatpush2.msra.mxu0 %v280
    %1279 = vmatprep.subr.mxu0 0.0
    %1280 = vmatpush2.msra.mxu0 %v279
    %1281 = vmatprep.mubr.f32.mxu0 %v626
    %1282 = vmatmul.mubr.f32.gmra.mxu0 %v624
    %v1283 = vpop.f32.mrf.mxu0
    %v1284 = vadd.f32 %v1214, %v1283
    %v1285 = vpop.f32.mrf.mxu0
    %1286 = vdwg.mxu0
    %1287 = vmatprep.subr.mxu0 0.0
    %1288 = vmatpush1.msra.mxu0 %v310
    %1289 = vmatprep.subr.mxu0 0.0
    %1290 = vmatpush1.msra.mxu0 %v309
    %1291 = vmatprep.subr.mxu0 0.0
    %1292 = vmatpush1.msra.mxu0 %v308
    %1293 = vmatprep.subr.mxu0 0.0
    %1294 = vmatpush1.msra.mxu0 %v307
    %1295 = vmatprep.subr.mxu0 0.0
    %1296 = vmatpush1.msra.mxu0 %v306
    %1297 = vmatprep.subr.mxu0 0.0
    %1298 = vmatpush1.msra.mxu0 %v305
    %1299 = vmatprep.subr.mxu0 0.0
    %1300 = vmatpush1.msra.mxu0 %v304
    %1301 = vmatprep.subr.mxu0 0.0
    %1302 = vmatpush1.msra.mxu0 %v303
    %1303 = vmatprep.subr.mxu0 0.0
    %1304 = vmatpush1.msra.mxu0 %v302
    %1305 = vmatprep.subr.mxu0 0.0
    %1306 = vmatpush1.msra.mxu0 %v301
    %1307 = vmatprep.subr.mxu0 0.0
    %1308 = vmatpush1.msra.mxu0 %v300
    %1309 = vmatprep.subr.mxu0 0.0
    %1310 = vmatpush1.msra.mxu0 %v299
    %1311 = vmatprep.subr.mxu0 0.0
    %1312 = vmatpush1.msra.mxu0 %v298
    %1313 = vmatprep.subr.mxu0 0.0
    %1314 = vmatpush1.msra.mxu0 %v297
    %1315 = vmatprep.subr.mxu0 0.0
    %1316 = vmatpush1.msra.mxu0 %v296
    %1317 = vmatprep.subr.mxu0 0.0
    %1318 = vmatpush1.msra.mxu0 %v295
    %1319 = vmatprep.subr.mxu0 0.0
    %1320 = vmatpush2.msra.mxu0 %v326
    %1321 = vmatprep.subr.mxu0 0.0
    %1322 = vmatpush2.msra.mxu0 %v325
    %1323 = vmatprep.subr.mxu0 0.0
    %1324 = vmatpush2.msra.mxu0 %v324
    %1325 = vmatprep.subr.mxu0 0.0
    %1326 = vmatpush2.msra.mxu0 %v323
    %1327 = vmatprep.subr.mxu0 0.0
    %1328 = vmatpush2.msra.mxu0 %v322
    %1329 = vmatprep.subr.mxu0 0.0
    %1330 = vmatpush2.msra.mxu0 %v321
    %1331 = vmatprep.subr.mxu0 0.0
    %1332 = vmatpush2.msra.mxu0 %v320
    %1333 = vmatprep.subr.mxu0 0.0
    %1334 = vmatpush2.msra.mxu0 %v319
    %1335 = vmatprep.subr.mxu0 0.0
    %1336 = vmatpush2.msra.mxu0 %v318
    %1337 = vmatprep.subr.mxu0 0.0
    %1338 = vmatpush2.msra.mxu0 %v317
    %1339 = vmatprep.subr.mxu0 0.0
    %1340 = vmatpush2.msra.mxu0 %v316
    %1341 = vmatprep.subr.mxu0 0.0
    %1342 = vmatpush2.msra.mxu0 %v315
    %1343 = vmatprep.subr.mxu0 0.0
    %1344 = vmatpush2.msra.mxu0 %v314
    %1345 = vmatprep.subr.mxu0 0.0
    %1346 = vmatpush2.msra.mxu0 %v313
    %1347 = vmatprep.subr.mxu0 0.0
    %1348 = vmatpush2.msra.mxu0 %v312
    %1349 = vmatprep.subr.mxu0 0.0
    %1350 = vmatpush2.msra.mxu0 %v311
    %1351 = vmatprep.mubr.f32.mxu0 %v642
    %1352 = vmatmul.mubr.f32.gmra.mxu0 %v634
    %v1353 = vpop.f32.mrf.mxu0
    %v1354 = vadd.f32 %v1284, %v1353
    %v1355 = vpop.f32.mrf.mxu0
    %1356 = vdwg.mxu0
    %1357 = vmatprep.subr.mxu0 0.0
    %1358 = vmatpush1.msra.mxu0 %v342
    %1359 = vmatprep.subr.mxu0 0.0
    %1360 = vmatpush1.msra.mxu0 %v341
    %1361 = vmatprep.subr.mxu0 0.0
    %1362 = vmatpush1.msra.mxu0 %v340
    %1363 = vmatprep.subr.mxu0 0.0
    %1364 = vmatpush1.msra.mxu0 %v339
    %1365 = vmatprep.subr.mxu0 0.0
    %1366 = vmatpush1.msra.mxu0 %v338
    %1367 = vmatprep.subr.mxu0 0.0
    %1368 = vmatpush1.msra.mxu0 %v337
    %1369 = vmatprep.subr.mxu0 0.0
    %1370 = vmatpush1.msra.mxu0 %v336
    %1371 = vmatprep.subr.mxu0 0.0
    %1372 = vmatpush1.msra.mxu0 %v335
    %1373 = vmatprep.subr.mxu0 0.0
    %1374 = vmatpush1.msra.mxu0 %v334
    %1375 = vmatprep.subr.mxu0 0.0
    %1376 = vmatpush1.msra.mxu0 %v333
    %1377 = vmatprep.subr.mxu0 0.0
    %1378 = vmatpush1.msra.mxu0 %v332
    %1379 = vmatprep.subr.mxu0 0.0
    %1380 = vmatpush1.msra.mxu0 %v331
    %1381 = vmatprep.subr.mxu0 0.0
    %1382 = vmatpush1.msra.mxu0 %v330
    %1383 = vmatprep.subr.mxu0 0.0
    %1384 = vmatpush1.msra.mxu0 %v329
    %1385 = vmatprep.subr.mxu0 0.0
    %1386 = vmatpush1.msra.mxu0 %v328
    %1387 = vmatprep.subr.mxu0 0.0
    %1388 = vmatpush1.msra.mxu0 %v327
    %1389 = vmatprep.subr.mxu0 0.0
    %1390 = vmatpush2.msra.mxu0 %v358
    %1391 = vmatprep.subr.mxu0 0.0
    %1392 = vmatpush2.msra.mxu0 %v357
    %1393 = vmatprep.subr.mxu0 0.0
    %1394 = vmatpush2.msra.mxu0 %v356
    %1395 = vmatprep.subr.mxu0 0.0
    %1396 = vmatpush2.msra.mxu0 %v355
    %1397 = vmatprep.subr.mxu0 0.0
    %1398 = vmatpush2.msra.mxu0 %v354
    %1399 = vmatprep.subr.mxu0 0.0
    %1400 = vmatpush2.msra.mxu0 %v353
    %1401 = vmatprep.subr.mxu0 0.0
    %1402 = vmatpush2.msra.mxu0 %v352
    %1403 = vmatprep.subr.mxu0 0.0
    %1404 = vmatpush2.msra.mxu0 %v351
    %1405 = vmatprep.subr.mxu0 0.0
    %1406 = vmatpush2.msra.mxu0 %v350
    %1407 = vmatprep.subr.mxu0 0.0
    %1408 = vmatpush2.msra.mxu0 %v349
    %1409 = vmatprep.subr.mxu0 0.0
    %1410 = vmatpush2.msra.mxu0 %v348
    %1411 = vmatprep.subr.mxu0 0.0
    %1412 = vmatpush2.msra.mxu0 %v347
    %1413 = vmatprep.subr.mxu0 0.0
    %1414 = vmatpush2.msra.mxu0 %v346
    %1415 = vmatprep.subr.mxu0 0.0
    %1416 = vmatpush2.msra.mxu0 %v345
    %1417 = vmatprep.subr.mxu0 0.0
    %1418 = vmatpush2.msra.mxu0 %v344
    %1419 = vmatprep.subr.mxu0 0.0
    %1420 = vmatpush2.msra.mxu0 %v343
    %1421 = vmatprep.mubr.f32.mxu0 %v643
    %1422 = vmatmul.mubr.f32.gmra.mxu0 %v641
    %v1423 = vpop.f32.mrf.mxu0
    %v1424 = vadd.f32 %v1354, %v1423
    %v1425 = vpop.f32.mrf.mxu0
    %1426 = vdwg.mxu0
    %1427 = vmatprep.subr.mxu0 0.0
    %1428 = vmatpush1.msra.mxu0 %v374
    %1429 = vmatprep.subr.mxu0 0.0
    %1430 = vmatpush1.msra.mxu0 %v373
    %1431 = vmatprep.subr.mxu0 0.0
    %1432 = vmatpush1.msra.mxu0 %v372
    %1433 = vmatprep.subr.mxu0 0.0
    %1434 = vmatpush1.msra.mxu0 %v371
    %1435 = vmatprep.subr.mxu0 0.0
    %1436 = vmatpush1.msra.mxu0 %v370
    %1437 = vmatprep.subr.mxu0 0.0
    %1438 = vmatpush1.msra.mxu0 %v369
    %1439 = vmatprep.subr.mxu0 0.0
    %1440 = vmatpush1.msra.mxu0 %v368
    %1441 = vmatprep.subr.mxu0 0.0
    %1442 = vmatpush1.msra.mxu0 %v367
    %1443 = vmatprep.subr.mxu0 0.0
    %1444 = vmatpush1.msra.mxu0 %v366
    %1445 = vmatprep.subr.mxu0 0.0
    %1446 = vmatpush1.msra.mxu0 %v365
    %1447 = vmatprep.subr.mxu0 0.0
    %1448 = vmatpush1.msra.mxu0 %v364
    %1449 = vmatprep.subr.mxu0 0.0
    %1450 = vmatpush1.msra.mxu0 %v363
    %1451 = vmatprep.subr.mxu0 0.0
    %1452 = vmatpush1.msra.mxu0 %v362
    %1453 = vmatprep.subr.mxu0 0.0
    %1454 = vmatpush1.msra.mxu0 %v361
    %1455 = vmatprep.subr.mxu0 0.0
    %1456 = vmatpush1.msra.mxu0 %v360
    %1457 = vmatprep.subr.mxu0 0.0
    %1458 = vmatpush1.msra.mxu0 %v359
    %1459 = vmatprep.subr.mxu0 0.0
    %1460 = vmatpush2.msra.mxu0 %v390
    %1461 = vmatprep.subr.mxu0 0.0
    %1462 = vmatpush2.msra.mxu0 %v389
    %1463 = vmatprep.subr.mxu0 0.0
    %1464 = vmatpush2.msra.mxu0 %v388
    %1465 = vmatprep.subr.mxu0 0.0
    %1466 = vmatpush2.msra.mxu0 %v387
    %1467 = vmatprep.subr.mxu0 0.0
    %1468 = vmatpush2.msra.mxu0 %v386
    %1469 = vmatprep.subr.mxu0 0.0
    %1470 = vmatpush2.msra.mxu0 %v385
    %1471 = vmatprep.subr.mxu0 0.0
    %1472 = vmatpush2.msra.mxu0 %v384
    %1473 = vmatprep.subr.mxu0 0.0
    %1474 = vmatpush2.msra.mxu0 %v383
    %1475 = vmatprep.subr.mxu0 0.0
    %1476 = vmatpush2.msra.mxu0 %v382
    %1477 = vmatprep.subr.mxu0 0.0
    %1478 = vmatpush2.msra.mxu0 %v381
    %1479 = vmatprep.subr.mxu0 0.0
    %1480 = vmatpush2.msra.mxu0 %v380
    %1481 = vmatprep.subr.mxu0 0.0
    %1482 = vmatpush2.msra.mxu0 %v379
    %1483 = vmatprep.subr.mxu0 0.0
    %1484 = vmatpush2.msra.mxu0 %v378
    %1485 = vmatprep.subr.mxu0 0.0
    %1486 = vmatpush2.msra.mxu0 %v377
    %1487 = vmatprep.subr.mxu0 0.0
    %1488 = vmatpush2.msra.mxu0 %v376
    %1489 = vmatprep.subr.mxu0 0.0
    %1490 = vmatpush2.msra.mxu0 %v375
    %1491 = vmatprep.mubr.f32.mxu0 %v659
    %1492 = vmatmul.mubr.f32.gmra.mxu0 %v651
    %v1493 = vpop.f32.mrf.mxu0
    %v1494 = vadd.f32 %v1424, %v1493
    %v1495 = vpop.f32.mrf.mxu0
    %1496 = vdwg.mxu0
    %1497 = vmatprep.subr.mxu0 0.0
    %1498 = vmatpush1.msra.mxu0 %v406
    %1499 = vmatprep.subr.mxu0 0.0
    %1500 = vmatpush1.msra.mxu0 %v405
    %1501 = vmatprep.subr.mxu0 0.0
    %1502 = vmatpush1.msra.mxu0 %v404
    %1503 = vmatprep.subr.mxu0 0.0
    %1504 = vmatpush1.msra.mxu0 %v403
    %1505 = vmatprep.subr.mxu0 0.0
    %1506 = vmatpush1.msra.mxu0 %v402
    %1507 = vmatprep.subr.mxu0 0.0
    %1508 = vmatpush1.msra.mxu0 %v401
    %1509 = vmatprep.subr.mxu0 0.0
    %1510 = vmatpush1.msra.mxu0 %v400
    %1511 = vmatprep.subr.mxu0 0.0
    %1512 = vmatpush1.msra.mxu0 %v399
    %1513 = vmatprep.subr.mxu0 0.0
    %1514 = vmatpush1.msra.mxu0 %v398
    %1515 = vmatprep.subr.mxu0 0.0
    %1516 = vmatpush1.msra.mxu0 %v397
    %1517 = vmatprep.subr.mxu0 0.0
    %1518 = vmatpush1.msra.mxu0 %v396
    %1519 = vmatprep.subr.mxu0 0.0
    %1520 = vmatpush1.msra.mxu0 %v395
    %1521 = vmatprep.subr.mxu0 0.0
    %1522 = vmatpush1.msra.mxu0 %v394
    %1523 = vmatprep.subr.mxu0 0.0
    %1524 = vmatpush1.msra.mxu0 %v393
    %1525 = vmatprep.subr.mxu0 0.0
    %1526 = vmatpush1.msra.mxu0 %v392
    %1527 = vmatprep.subr.mxu0 0.0
    %1528 = vmatpush1.msra.mxu0 %v391
    %1529 = vmatprep.subr.mxu0 0.0
    %1530 = vmatpush2.msra.mxu0 %v422
    %1531 = vmatprep.subr.mxu0 0.0
    %1532 = vmatpush2.msra.mxu0 %v421
    %1533 = vmatprep.subr.mxu0 0.0
    %1534 = vmatpush2.msra.mxu0 %v420
    %1535 = vmatprep.subr.mxu0 0.0
    %1536 = vmatpush2.msra.mxu0 %v419
    %1537 = vmatprep.subr.mxu0 0.0
    %1538 = vmatpush2.msra.mxu0 %v418
    %1539 = vmatprep.subr.mxu0 0.0
    %1540 = vmatpush2.msra.mxu0 %v417
    %1541 = vmatprep.subr.mxu0 0.0
    %1542 = vmatpush2.msra.mxu0 %v416
    %1543 = vmatprep.subr.mxu0 0.0
    %1544 = vmatpush2.msra.mxu0 %v415
    %1545 = vmatprep.subr.mxu0 0.0
    %1546 = vmatpush2.msra.mxu0 %v414
    %1547 = vmatprep.subr.mxu0 0.0
    %1548 = vmatpush2.msra.mxu0 %v413
    %1549 = vmatprep.subr.mxu0 0.0
    %1550 = vmatpush2.msra.mxu0 %v412
    %1551 = vmatprep.subr.mxu0 0.0
    %1552 = vmatpush2.msra.mxu0 %v411
    %1553 = vmatprep.subr.mxu0 0.0
    %1554 = vmatpush2.msra.mxu0 %v410
    %1555 = vmatprep.subr.mxu0 0.0
    %1556 = vmatpush2.msra.mxu0 %v409
    %1557 = vmatprep.subr.mxu0 0.0
    %1558 = vmatpush2.msra.mxu0 %v408
    %1559 = vmatprep.subr.mxu0 0.0
    %1560 = vmatpush2.msra.mxu0 %v407
    %1561 = vmatprep.mubr.f32.mxu0 %v660
    %1562 = vmatmul.mubr.f32.gmra.mxu0 %v658
    %v1563 = vpop.f32.mrf.mxu0
    %v1564 = vadd.f32 %v1494, %v1563
    %v1565 = vpop.f32.mrf.mxu0
    %1566 = vdwg.mxu0
    %1567 = vmatprep.subr.mxu0 0.0
    %1568 = vmatpush1.msra.mxu0 %v438
    %1569 = vmatprep.subr.mxu0 0.0
    %1570 = vmatpush1.msra.mxu0 %v437
    %1571 = vmatprep.subr.mxu0 0.0
    %1572 = vmatpush1.msra.mxu0 %v436
    %1573 = vmatprep.subr.mxu0 0.0
    %1574 = vmatpush1.msra.mxu0 %v435
    %1575 = vmatprep.subr.mxu0 0.0
    %1576 = vmatpush1.msra.mxu0 %v434
    %1577 = vmatprep.subr.mxu0 0.0
    %1578 = vmatpush1.msra.mxu0 %v433
    %1579 = vmatprep.subr.mxu0 0.0
    %1580 = vmatpush1.msra.mxu0 %v432
    %1581 = vmatprep.subr.mxu0 0.0
    %1582 = vmatpush1.msra.mxu0 %v431
    %1583 = vmatprep.subr.mxu0 0.0
    %1584 = vmatpush1.msra.mxu0 %v430
    %1585 = vmatprep.subr.mxu0 0.0
    %1586 = vmatpush1.msra.mxu0 %v429
    %1587 = vmatprep.subr.mxu0 0.0
    %1588 = vmatpush1.msra.mxu0 %v428
    %1589 = vmatprep.subr.mxu0 0.0
    %1590 = vmatpush1.msra.mxu0 %v427
    %1591 = vmatprep.subr.mxu0 0.0
    %1592 = vmatpush1.msra.mxu0 %v426
    %1593 = vmatprep.subr.mxu0 0.0
    %1594 = vmatpush1.msra.mxu0 %v425
    %1595 = vmatprep.subr.mxu0 0.0
    %1596 = vmatpush1.msra.mxu0 %v424
    %1597 = vmatprep.subr.mxu0 0.0
    %1598 = vmatpush1.msra.mxu0 %v423
    %1599 = vmatprep.subr.mxu0 0.0
    %1600 = vmatpush2.msra.mxu0 %v454
    %1601 = vmatprep.subr.mxu0 0.0
    %1602 = vmatpush2.msra.mxu0 %v453
    %1603 = vmatprep.subr.mxu0 0.0
    %1604 = vmatpush2.msra.mxu0 %v452
    %1605 = vmatprep.subr.mxu0 0.0
    %1606 = vmatpush2.msra.mxu0 %v451
    %1607 = vmatprep.subr.mxu0 0.0
    %1608 = vmatpush2.msra.mxu0 %v450
    %1609 = vmatprep.subr.mxu0 0.0
    %1610 = vmatpush2.msra.mxu0 %v449
    %1611 = vmatprep.subr.mxu0 0.0
    %1612 = vmatpush2.msra.mxu0 %v448
    %1613 = vmatprep.subr.mxu0 0.0
    %1614 = vmatpush2.msra.mxu0 %v447
    %1615 = vmatprep.subr.mxu0 0.0
    %1616 = vmatpush2.msra.mxu0 %v446
    %1617 = vmatprep.subr.mxu0 0.0
    %1618 = vmatpush2.msra.mxu0 %v445
    %1619 = vmatprep.subr.mxu0 0.0
    %1620 = vmatpush2.msra.mxu0 %v444
    %1621 = vmatprep.subr.mxu0 0.0
    %1622 = vmatpush2.msra.mxu0 %v443
    %1623 = vmatprep.subr.mxu0 0.0
    %1624 = vmatpush2.msra.mxu0 %v442
    %1625 = vmatprep.subr.mxu0 0.0
    %1626 = vmatpush2.msra.mxu0 %v441
    %1627 = vmatprep.subr.mxu0 0.0
    %1628 = vmatpush2.msra.mxu0 %v440
    %1629 = vmatprep.subr.mxu0 0.0
    %1630 = vmatpush2.msra.mxu0 %v439
    %1631 = vmatprep.mubr.f32.mxu0 %v676
    %1632 = vmatmul.mubr.f32.gmra.mxu0 %v668
    %v1633 = vpop.f32.mrf.mxu0
    %v1634 = vadd.f32 %v1564, %v1633
    %v1635 = vpop.f32.mrf.mxu0
    %1636 = vdwg.mxu0
    %1637 = vmatprep.subr.mxu0 0.0
    %1638 = vmatpush1.msra.mxu0 %v470
    %1639 = vmatprep.subr.mxu0 0.0
    %1640 = vmatpush1.msra.mxu0 %v469
    %1641 = vmatprep.subr.mxu0 0.0
    %1642 = vmatpush1.msra.mxu0 %v468
    %1643 = vmatprep.subr.mxu0 0.0
    %1644 = vmatpush1.msra.mxu0 %v467
    %1645 = vmatprep.subr.mxu0 0.0
    %1646 = vmatpush1.msra.mxu0 %v466
    %1647 = vmatprep.subr.mxu0 0.0
    %1648 = vmatpush1.msra.mxu0 %v465
    %1649 = vmatprep.subr.mxu0 0.0
    %1650 = vmatpush1.msra.mxu0 %v464
    %1651 = vmatprep.subr.mxu0 0.0
    %1652 = vmatpush1.msra.mxu0 %v463
    %1653 = vmatprep.subr.mxu0 0.0
    %1654 = vmatpush1.msra.mxu0 %v462
    %1655 = vmatprep.subr.mxu0 0.0
    %1656 = vmatpush1.msra.mxu0 %v461
    %1657 = vmatprep.subr.mxu0 0.0
    %1658 = vmatpush1.msra.mxu0 %v460
    %1659 = vmatprep.subr.mxu0 0.0
    %1660 = vmatpush1.msra.mxu0 %v459
    %1661 = vmatprep.subr.mxu0 0.0
    %1662 = vmatpush1.msra.mxu0 %v458
    %1663 = vmatprep.subr.mxu0 0.0
    %1664 = vmatpush1.msra.mxu0 %v457
    %1665 = vmatprep.subr.mxu0 0.0
    %1666 = vmatpush1.msra.mxu0 %v456
    %1667 = vmatprep.subr.mxu0 0.0
    %1668 = vmatpush1.msra.mxu0 %v455
    %1669 = vmatprep.subr.mxu0 0.0
    %1670 = vmatpush2.msra.mxu0 %v486
    %1671 = vmatprep.subr.mxu0 0.0
    %1672 = vmatpush2.msra.mxu0 %v485
    %1673 = vmatprep.subr.mxu0 0.0
    %1674 = vmatpush2.msra.mxu0 %v484
    %1675 = vmatprep.subr.mxu0 0.0
    %1676 = vmatpush2.msra.mxu0 %v483
    %1677 = vmatprep.subr.mxu0 0.0
    %1678 = vmatpush2.msra.mxu0 %v482
    %1679 = vmatprep.subr.mxu0 0.0
    %1680 = vmatpush2.msra.mxu0 %v481
    %1681 = vmatprep.subr.mxu0 0.0
    %1682 = vmatpush2.msra.mxu0 %v480
    %1683 = vmatprep.subr.mxu0 0.0
    %1684 = vmatpush2.msra.mxu0 %v479
    %1685 = vmatprep.subr.mxu0 0.0
    %1686 = vmatpush2.msra.mxu0 %v478
    %1687 = vmatprep.subr.mxu0 0.0
    %1688 = vmatpush2.msra.mxu0 %v477
    %1689 = vmatprep.subr.mxu0 0.0
    %1690 = vmatpush2.msra.mxu0 %v476
    %1691 = vmatprep.subr.mxu0 0.0
    %1692 = vmatpush2.msra.mxu0 %v475
    %1693 = vmatprep.subr.mxu0 0.0
    %1694 = vmatpush2.msra.mxu0 %v474
    %1695 = vmatprep.subr.mxu0 0.0
    %1696 = vmatpush2.msra.mxu0 %v473
    %1697 = vmatprep.subr.mxu0 0.0
    %1698 = vmatpush2.msra.mxu0 %v472
    %1699 = vmatprep.subr.mxu0 0.0
    %1700 = vmatpush2.msra.mxu0 %v471
    %1701 = vmatprep.mubr.f32.mxu0 %v677
    %1702 = vmatmul.mubr.f32.gmra.mxu0 %v675
    %v1703 = vpop.f32.mrf.mxu0
    %v1704 = vadd.f32 %v1634, %v1703
    %v1705 = vpop.f32.mrf.mxu0
    %1706 = vdwg.mxu0
    %1707 = vmatprep.subr.mxu0 0.0
    %1708 = vmatpush1.msra.mxu0 %v502
    %1709 = vmatprep.subr.mxu0 0.0
    %1710 = vmatpush1.msra.mxu0 %v501
    %1711 = vmatprep.subr.mxu0 0.0
    %1712 = vmatpush1.msra.mxu0 %v500
    %1713 = vmatprep.subr.mxu0 0.0
    %1714 = vmatpush1.msra.mxu0 %v499
    %1715 = vmatprep.subr.mxu0 0.0
    %1716 = vmatpush1.msra.mxu0 %v498
    %1717 = vmatprep.subr.mxu0 0.0
    %1718 = vmatpush1.msra.mxu0 %v497
    %1719 = vmatprep.subr.mxu0 0.0
    %1720 = vmatpush1.msra.mxu0 %v496
    %1721 = vmatprep.subr.mxu0 0.0
    %1722 = vmatpush1.msra.mxu0 %v495
    %1723 = vmatprep.subr.mxu0 0.0
    %1724 = vmatpush1.msra.mxu0 %v494
    %1725 = vmatprep.subr.mxu0 0.0
    %1726 = vmatpush1.msra.mxu0 %v493
    %1727 = vmatprep.subr.mxu0 0.0
    %1728 = vmatpush1.msra.mxu0 %v492
    %1729 = vmatprep.subr.mxu0 0.0
    %1730 = vmatpush1.msra.mxu0 %v491
    %1731 = vmatprep.subr.mxu0 0.0
    %1732 = vmatpush1.msra.mxu0 %v490
    %1733 = vmatprep.subr.mxu0 0.0
    %1734 = vmatpush1.msra.mxu0 %v489
    %1735 = vmatprep.subr.mxu0 0.0
    %1736 = vmatpush1.msra.mxu0 %v488
    %1737 = vmatprep.subr.mxu0 0.0
    %1738 = vmatpush1.msra.mxu0 %v487
    %1739 = vmatprep.subr.mxu0 0.0
    %1740 = vmatpush2.msra.mxu0 %v518
    %1741 = vmatprep.subr.mxu0 0.0
    %1742 = vmatpush2.msra.mxu0 %v517
    %1743 = vmatprep.subr.mxu0 0.0
    %1744 = vmatpush2.msra.mxu0 %v516
    %1745 = vmatprep.subr.mxu0 0.0
    %1746 = vmatpush2.msra.mxu0 %v515
    %1747 = vmatprep.subr.mxu0 0.0
    %1748 = vmatpush2.msra.mxu0 %v514
    %1749 = vmatprep.subr.mxu0 0.0
    %1750 = vmatpush2.msra.mxu0 %v513
    %1751 = vmatprep.subr.mxu0 0.0
    %1752 = vmatpush2.msra.mxu0 %v512
    %1753 = vmatprep.subr.mxu0 0.0
    %1754 = vmatpush2.msra.mxu0 %v511
    %1755 = vmatprep.subr.mxu0 0.0
    %1756 = vmatpush2.msra.mxu0 %v510
    %1757 = vmatprep.subr.mxu0 0.0
    %1758 = vmatpush2.msra.mxu0 %v509
    %1759 = vmatprep.subr.mxu0 0.0
    %1760 = vmatpush2.msra.mxu0 %v508
    %1761 = vmatprep.subr.mxu0 0.0
    %1762 = vmatpush2.msra.mxu0 %v507
    %1763 = vmatprep.subr.mxu0 0.0
    %1764 = vmatpush2.msra.mxu0 %v506
    %1765 = vmatprep.subr.mxu0 0.0
    %1766 = vmatpush2.msra.mxu0 %v505
    %1767 = vmatprep.subr.mxu0 0.0
    %1768 = vmatpush2.msra.mxu0 %v504
    %1769 = vmatprep.subr.mxu0 0.0
    %1770 = vmatpush2.msra.mxu0 %v503
    %1771 = vmatprep.mubr.f32.mxu0 %v693
    %1772 = vmatmul.mubr.f32.gmra.mxu0 %v685
    %v1773 = vpop.f32.mrf.mxu0
    %v1774 = vadd.f32 %v1704, %v1773
    %v1775 = vpop.f32.mrf.mxu0
    %1776 = vdwg.mxu0
    %1777 = vmatprep.subr.mxu0 0.0
    %1778 = vmatpush1.msra.mxu0 %v534
    %1779 = vmatprep.subr.mxu0 0.0
    %1780 = vmatpush1.msra.mxu0 %v533
    %1781 = vmatprep.subr.mxu0 0.0
    %1782 = vmatpush1.msra.mxu0 %v532
    %1783 = vmatprep.subr.mxu0 0.0
    %1784 = vmatpush1.msra.mxu0 %v531
    %1785 = vmatprep.subr.mxu0 0.0
    %1786 = vmatpush1.msra.mxu0 %v530
    %1787 = vmatprep.subr.mxu0 0.0
    %1788 = vmatpush1.msra.mxu0 %v529
    %1789 = vmatprep.subr.mxu0 0.0
    %1790 = vmatpush1.msra.mxu0 %v528
    %1791 = vmatprep.subr.mxu0 0.0
    %1792 = vmatpush1.msra.mxu0 %v527
    %1793 = vmatprep.subr.mxu0 0.0
    %1794 = vmatpush1.msra.mxu0 %v526
    %1795 = vmatprep.subr.mxu0 0.0
    %1796 = vmatpush1.msra.mxu0 %v525
    %1797 = vmatprep.subr.mxu0 0.0
    %1798 = vmatpush1.msra.mxu0 %v524
    %1799 = vmatprep.subr.mxu0 0.0
    %1800 = vmatpush1.msra.mxu0 %v523
    %1801 = vmatprep.subr.mxu0 0.0
    %1802 = vmatpush1.msra.mxu0 %v522
    %1803 = vmatprep.subr.mxu0 0.0
    %1804 = vmatpush1.msra.mxu0 %v521
    %1805 = vmatprep.subr.mxu0 0.0
    %1806 = vmatpush1.msra.mxu0 %v520
    %1807 = vmatprep.subr.mxu0 0.0
    %1808 = vmatpush1.msra.mxu0 %v519
    %1809 = vmatprep.subr.mxu0 0.0
    %1810 = vmatpush2.msra.mxu0 %v550
    %1811 = vmatprep.subr.mxu0 0.0
    %1812 = vmatpush2.msra.mxu0 %v549
    %1813 = vmatprep.subr.mxu0 0.0
    %1814 = vmatpush2.msra.mxu0 %v548
    %1815 = vmatprep.subr.mxu0 0.0
    %1816 = vmatpush2.msra.mxu0 %v547
    %1817 = vmatprep.subr.mxu0 0.0
    %1818 = vmatpush2.msra.mxu0 %v546
    %1819 = vmatprep.subr.mxu0 0.0
    %1820 = vmatpush2.msra.mxu0 %v545
    %1821 = vmatprep.subr.mxu0 0.0
    %1822 = vmatpush2.msra.mxu0 %v544
    %1823 = vmatprep.subr.mxu0 0.0
    %1824 = vmatpush2.msra.mxu0 %v543
    %1825 = vmatprep.subr.mxu0 0.0
    %1826 = vmatpush2.msra.mxu0 %v542
    %1827 = vmatprep.subr.mxu0 0.0
    %1828 = vmatpush2.msra.mxu0 %v541
    %1829 = vmatprep.subr.mxu0 0.0
    %1830 = vmatpush2.msra.mxu0 %v540
    %1831 = vmatprep.subr.mxu0 0.0
    %1832 = vmatpush2.msra.mxu0 %v539
    %1833 = vmatprep.subr.mxu0 0.0
    %1834 = vmatpush2.msra.mxu0 %v538
    %1835 = vmatprep.subr.mxu0 0.0
    %1836 = vmatpush2.msra.mxu0 %v537
    %1837 = vmatprep.subr.mxu0 0.0
    %1838 = vmatpush2.msra.mxu0 %v536
    %1839 = vmatprep.subr.mxu0 0.0
    %1840 = vmatpush2.msra.mxu0 %v535
    %1841 = vmatprep.mubr.f32.mxu0 %v694
    %1842 = vmatmul.mubr.f32.gmra.mxu0 %v692
    %v1843 = vpop.f32.mrf.mxu0
    %v1844 = vadd.f32 %v1774, %v1843
    %v1845 = vpop.f32.mrf.mxu0
    %1846 = vdwg.mxu0
    %v1847 = vadd.f32 %v38, %v1844
    %vm1848 = vcmask 25600
    %1849 = vst.msk [vmem:[#allocation2] sm:$0x3] %vm1848, %v1847
    // Predicated region
    $region30: #{tpu_custom_call.1} parent=1 // pred_check
      %p1850 = pneg %p24
    $region31: #{tpu_custom_call.1} parent=1 // pred_check_branch
      %1852 = sbr.rel (%p1850) target = $region33
    $region32: #{tpu_custom_call.1} parent=1 // pred_region
      %v1853 = vld [vmem:[#allocation2] sm:$0x3]
      %v1854 = vld [vmem:[%s2] sm:$0xf]
      %v1855 = vld [vmem:[%s3] sm:$0x1]
      %v1857 = vlaneseq
      %v1858 = vshrl.u32 %v1857, 7
      %v1859 = vsub.s32 0, %v1858
      %v1860 = vrot.slane %v1855, %v1859
      %vm1862 = vcmask 31744
      %v1864 = vsel %vm1862, %v1853, 0
      %vm1866 = vcmask 1043456
      %v1868 = vsel %vm1866, %v1854, 0
      %1870 = vmatprep.subr.mxu0 0.0
      %1871 = vmatpush1.msra.mxu0 0.0
      %1872 = vmatprep.subr.mxu0 0.0
      %1873 = vmatpush1.msra.mxu0 0.0
      %1874 = vmatprep.subr.mxu0 0.0
      %1875 = vmatpush1.msra.mxu0 0.0
      %1876 = vmatprep.subr.mxu0 0.0
      %1877 = vmatpush1.msra.mxu0 0.0
      %1878 = vmatprep.subr.mxu0 0.0
      %1879 = vmatpush1.msra.mxu0 0.0
      %1880 = vmatprep.subr.mxu0 0.0
      %1881 = vmatpush1.msra.mxu0 0.0
      %1882 = vmatprep.subr.mxu0 0.0
      %1883 = vmatpush1.msra.mxu0 0.0
      %1884 = vmatprep.subr.mxu0 0.0
      %1885 = vmatpush1.msra.mxu0 0.0
      %1886 = vmatprep.subr.mxu0 0.0
      %1887 = vmatpush1.msra.mxu0 0.0
      %1888 = vmatprep.subr.mxu0 0.0
      %1889 = vmatpush1.msra.mxu0 0.0
      %1890 = vmatprep.subr.mxu0 0.0
      %1891 = vmatpush1.msra.mxu0 0.0
      %1892 = vmatprep.subr.mxu0 0.0
      %1893 = vmatpush1.msra.mxu0 0.0
      %1894 = vmatprep.subr.mxu0 0.0
      %1895 = vmatpush1.msra.mxu0 0.0
      %1896 = vmatprep.subr.mxu0 0.0
      %1897 = vmatpush1.msra.mxu0 0.0
      %1898 = vmatprep.subr.mxu0 0.0
      %1899 = vmatpush1.msra.mxu0 0.0
      %1900 = vmatprep.subr.mxu0 0.0
      %1901 = vmatpush1.msra.mxu0 %v1868
      %1902 = vmatprep.subr.mxu0 0.0
      %1903 = vmatpush2.msra.mxu0 0.0
      %1904 = vmatprep.subr.mxu0 0.0
      %1905 = vmatpush2.msra.mxu0 0.0
      %1906 = vmatprep.subr.mxu0 0.0
      %1907 = vmatpush2.msra.mxu0 0.0
      %1908 = vmatprep.subr.mxu0 0.0
      %1909 = vmatpush2.msra.mxu0 0.0
      %1910 = vmatprep.subr.mxu0 0.0
      %1911 = vmatpush2.msra.mxu0 0.0
      %1912 = vmatprep.subr.mxu0 0.0
      %1913 = vmatpush2.msra.mxu0 0.0
      %1914 = vmatprep.subr.mxu0 0.0
      %1915 = vmatpush2.msra.mxu0 0.0
      %1916 = vmatprep.subr.mxu0 0.0
      %1917 = vmatpush2.msra.mxu0 0.0
      %1918 = vmatprep.subr.mxu0 0.0
      %1919 = vmatpush2.msra.mxu0 0.0
      %1920 = vmatprep.subr.mxu0 0.0
      %1921 = vmatpush2.msra.mxu0 0.0
      %1922 = vmatprep.subr.mxu0 0.0
      %1923 = vmatpush2.msra.mxu0 0.0
      %1924 = vmatprep.subr.mxu0 0.0
      %1925 = vmatpush2.msra.mxu0 0.0
      %1926 = vmatprep.subr.mxu0 0.0
      %1927 = vmatpush2.msra.mxu0 0.0
      %1928 = vmatprep.subr.mxu0 0.0
      %1929 = vmatpush2.msra.mxu0 0.0
      %1930 = vmatprep.subr.mxu0 0.0
      %1931 = vmatpush2.msra.mxu0 0.0
      %1932 = vmatprep.subr.mxu0 0.0
      %1933 = vmatpush2.msra.mxu0 0.0
      %1934 = vmatprep.mubr.f32.mxu0 0.0
      %1935 = vmatmul.mubr.f32.gmra.mxu0 %v1864
      %v1936 = vpop.f32.mrf.mxu0
      %v1937 = vadd.f32 %v1860, %v1936
      %v1938 = vpop.f32.mrf.mxu0
      %1939 = vdwg.mxu0
      %v1940 = vld [vmem:[%s4] sm:$0xff]
      %v1941 = vld [vmem:[%s4 + $0x8] sm:$0xff]
      %v1942 = vld [vmem:[%s4 + $0x10] sm:$0xff]
      %v1943 = vld [vmem:[%s4 + $0x18] sm:$0xff]
      %v1944 = vld [vmem:[%s5] sm:$0x1]
      %v1946 = vlaneseq
      %v1947 = vshrl.u32 %v1946, 7
      %v1948 = vsub.s32 0, %v1947
      %v1949 = vrot.slane %v1944, %v1948
      %vm1951 = vcmask 261120
      %v1953 = vsel %vm1951, %v1937, 0
      %1955 = vmatprep.subr.mxu0 0.0
      %1956 = vmatpush1.msra.mxu0 0.0
      %1957 = vmatprep.subr.mxu0 0.0
      %1958 = vmatpush1.msra.mxu0 0.0
      %1959 = vmatprep.subr.mxu0 0.0
      %1960 = vmatpush1.msra.mxu0 0.0
      %1961 = vmatprep.subr.mxu0 0.0
      %1962 = vmatpush1.msra.mxu0 0.0
      %1963 = vmatprep.subr.mxu0 0.0
      %1964 = vmatpush1.msra.mxu0 0.0
      %1965 = vmatprep.subr.mxu0 0.0
      %1966 = vmatpush1.msra.mxu0 0.0
      %1967 = vmatprep.subr.mxu0 0.0
      %1968 = vmatpush1.msra.mxu0 0.0
      %1969 = vmatprep.subr.mxu0 0.0
      %1970 = vmatpush1.msra.mxu0 0.0
      %1971 = vmatprep.subr.mxu0 0.0
      %1972 = vmatpush1.msra.mxu0 0.0
      %1973 = vmatprep.subr.mxu0 0.0
      %1974 = vmatpush1.msra.mxu0 0.0
      %1975 = vmatprep.subr.mxu0 0.0
      %1976 = vmatpush1.msra.mxu0 0.0
      %1977 = vmatprep.subr.mxu0 0.0
      %1978 = vmatpush1.msra.mxu0 0.0
      %1979 = vmatprep.subr.mxu0 0.0
      %1980 = vmatpush1.msra.mxu0 %v1943
      %1981 = vmatprep.subr.mxu0 0.0
      %1982 = vmatpush1.msra.mxu0 %v1942
      %1983 = vmatprep.subr.mxu0 0.0
      %1984 = vmatpush1.msra.mxu0 %v1941
      %1985 = vmatprep.subr.mxu0 0.0
      %1986 = vmatpush1.msra.mxu0 %v1940
      %1987 = vmatprep.subr.mxu0 0.0
      %1988 = vmatpush2.msra.mxu0 0.0
      %1989 = vmatprep.subr.mxu0 0.0
      %1990 = vmatpush2.msra.mxu0 0.0
      %1991 = vmatprep.subr.mxu0 0.0
      %1992 = vmatpush2.msra.mxu0 0.0
      %1993 = vmatprep.subr.mxu0 0.0
      %1994 = vmatpush2.msra.mxu0 0.0
      %1995 = vmatprep.subr.mxu0 0.0
      %1996 = vmatpush2.msra.mxu0 0.0
      %1997 = vmatprep.subr.mxu0 0.0
      %1998 = vmatpush2.msra.mxu0 0.0
      %1999 = vmatprep.subr.mxu0 0.0
      %2000 = vmatpush2.msra.mxu0 0.0
      %2001 = vmatprep.subr.mxu0 0.0
      %2002 = vmatpush2.msra.mxu0 0.0
      %2003 = vmatprep.subr.mxu0 0.0
      %2004 = vmatpush2.msra.mxu0 0.0
      %2005 = vmatprep.subr.mxu0 0.0
      %2006 = vmatpush2.msra.mxu0 0.0
      %2007 = vmatprep.subr.mxu0 0.0
      %2008 = vmatpush2.msra.mxu0 0.0
      %2009 = vmatprep.subr.mxu0 0.0
      %2010 = vmatpush2.msra.mxu0 0.0
      %2011 = vmatprep.subr.mxu0 0.0
      %2012 = vmatpush2.msra.mxu0 0.0
      %2013 = vmatprep.subr.mxu0 0.0
      %2014 = vmatpush2.msra.mxu0 0.0
      %2015 = vmatprep.subr.mxu0 0.0
      %2016 = vmatpush2.msra.mxu0 0.0
      %2017 = vmatprep.subr.mxu0 0.0
      %2018 = vmatpush2.msra.mxu0 0.0
      %2019 = vmatprep.mubr.f32.mxu0 0.0
      %2020 = vmatmul.mubr.f32.gmra.mxu0 %v1953
      %v2021 = vpop.f32.mrf.mxu0
      %v2022 = vadd.f32 %v1949, %v2021
      %v2023 = vpop.f32.mrf.mxu0
      %2024 = vdwg.mxu0
      %vm2025 = vcmask 9216
      %2026 = vst.msk [vmem:[#allocation3] sm:$0x3] %vm2025, %v2022
    $region33: #{tpu_custom_call.1} parent=1 // pred_fallthru
      _
    // Predicated region
    $region34: #{tpu_custom_call.1} parent=1 // pred_check
      _
    $region35: #{tpu_custom_call.1} parent=1 // pred_check_branch
      %2028 = sbr.rel (0) target = $region37
    $region36: #{tpu_custom_call.1} parent=1 // pred_region
      %s2030 = ssub.s32 32, 32
      %2031 = vsyncadd [#allocation4], %s2030
      %s2033 = sshll.u32 [#allocation3], 4
      %s2034 = int_to_ptr.vmem [resolvable:$true] %s2033
      %2036 = dma.vmem_to_hbm [thread:$0]  %s2034, 32, %s6, [#allocation4]
    $region37: #{tpu_custom_call.1} parent=1 // pred_fallthru
      _
    // Predicated region
    $region38: #{tpu_custom_call.1} parent=1 // pred_check
      _
    $region39: #{tpu_custom_call.1} parent=1 // pred_check_branch
      %2038 = sbr.rel (0) target = $region41
    $region40: #{tpu_custom_call.1} parent=1 // pred_region
      %2039 = dma.done [#allocation4], 32
    $region41: #{tpu_custom_call.1} parent=1 // pred_fallthru
      _
    %2040 = vsyncpa [#allocation4], 1

</llo_original>
